<compile_context>
chip_gen: v5e
topology: v5e:2x2
jax: 0.10.0
libtpu: 0.0.40
codegen_flags: <defaults>
</compile_context>

<pallas_src>
import functools

import jax
import jax.numpy as jnp
from jax import lax
from jax.experimental import pallas as pl
from jax.experimental.pallas import tpu as pltpu


def _round_up(x, m):
    return (x + m - 1) // m * m


def _fold_bn(gamma, beta, mean, var, eps=1e-5):
    scale = gamma / jnp.sqrt(var + eps)
    bias = beta - mean * scale
    return scale, bias


def _dsnet_kernel(x_hbm, dww_ref, dwb_ref, pww_ref, pwb_ref, out_ref,
                  xt_ref, dma_sem, *, KH, KW, stride, dilation,
                  TH, TH_in, Wo, Cp, Cop):
    """One (batch, output-row-tile) grid step.

    x_hbm   : (N, Hp, Wp, Cp)      padded NHWC input, left in HBM (pl.ANY)
    dww_ref : (KH*KW, 1, Cp)       depthwise weights with BN scale folded in
    dwb_ref : (1, 1, Cp)           depthwise folded BN bias
    pww_ref : (Cp, Cop) bf16       1x1 weights with BN scale folded in
    pwb_ref : (1, Cop)             pointwise folded BN bias
    out_ref : (1, TH*Wo, Cop)      lane-dense output tile
    xt_ref  : (2, TH_in, Wp, Cp)   double-buffered VMEM input tile (with halo)
    dma_sem : (2,)                 DMA semaphores, one per slot
    """
    n = pl.program_id(0)
    ht = pl.program_id(1)
    n_ht = pl.num_programs(1)
    slot = ht & 1

    def start_fetch(tile_idx, slot_idx):
        row0 = tile_idx * (TH * stride)
        pltpu.make_async_copy(x_hbm.at[n, pl.ds(row0, TH_in)],
                              xt_ref.at[slot_idx],
                              dma_sem.at[slot_idx]).start()

    # First row-tile of an image: nothing was prefetched for it yet.
    @pl.when(ht == 0)
    def _():
        start_fetch(0, 0)

    # Prefetch the next row-tile of the same image into the other slot so the
    # HBM read overlaps this step's compute (row-tile axis is "arbitrary").
    @pl.when(ht + 1 < n_ht)
    def _():
        start_fetch(ht + 1, (ht + 1) & 1)

    # Wait for this tile's data (shape of the descriptor matches the start).
    pltpu.make_async_copy(x_hbm.at[n, pl.ds(0, TH_in)],
                          xt_ref.at[slot], dma_sem.at[slot]).wait()

    xv = xt_ref.at[slot]

    # Depthwise conv: BN scale already folded into dww -> taps + bias + ReLU.
    acc = None
    for kh in range(KH):
        for kw in range(KW):
            h0 = kh * dilation
            w0 = kw * dilation
            if stride == 1:
                sl = xv[h0:h0 + TH, w0:w0 + Wo, :]
            else:
                # Strided selection at the ref level (cheap vld path).
                sl = xv[pl.ds(h0, TH, stride), pl.ds(w0, Wo, stride), :]
            contrib = sl * dww_ref[kh * KW + kw]          # (TH,Wo,Cp) * (1,Cp)
            acc = contrib if acc is None else acc + contrib
    y = jnp.maximum(acc + dwb_ref[...], 0.0)              # (TH, Wo, Cp) f32

    # Pointwise 1x1 conv == matmul over channels: bf16 on the MXU, f32 accum.
    y2 = y.reshape(TH * Wo, Cp).astype(jnp.bfloat16)
    z = jnp.dot(y2, pww_ref[...], preferred_element_type=jnp.float32)
    z = jnp.maximum(z + pwb_ref[...], 0.0)                # (TH*Wo, Cop) f32
    out_ref[0] = z


def _pick_tile_rows(Ho, Wo, stride, KH, dilation, Wp, Cp,
                    max_rows=64, in_tile_budget_bytes=16 << 20):
    """Largest divisor of Ho keeping the (double-buffered) input tile within a
    VMEM budget and the output block (tile_rows*Wo, Cop) sublane-aligned."""
    candidates = [t for t in range(1, Ho + 1)
                  if Ho % t == 0 and ((t * Wo) % 8 == 0 or t == Ho)]
    best = candidates[0]
    for t in candidates:
        if t > max_rows:
            continue
        t_in = (t - 1) * stride + (KH - 1) * dilation + 1
        if 2 * t_in * Wp * Cp * 4 <= in_tile_budget_bytes:
            best = max(best, t)
    return best


def dsnet_block(x_nchw, params, *, kernel_size, stride, dilation, padding,
                tile_rows=None):
    """DSNetBlock forward (inference). x_nchw: (N, C, H, W) f32. Returns NCHW."""
    N, C, H, W = x_nchw.shape
    KH = KW = kernel_size
    Cout = params["pw_weight"].shape[0]

    Ho = (H + 2 * padding - dilation * (KH - 1) - 1) // stride + 1
    Wo = (W + 2 * padding - dilation * (KW - 1) - 1) // stride + 1

    # Pad channels to the 128-lane width: full VPU lanes, full MXU K/N, and a
    # lane-dense output store (no masked vst).
    # TODO(synk): for genuinely tiny C a W-on-lanes layout with pltpu.roll taps
    #             would avoid the zero-padding DMA overhead.
    Cp = _round_up(C, 128)
    Cop = _round_up(Cout, 128)

    # NCHW -> NHWC, zero-pad spatial and channel dims.
    x = jnp.transpose(x_nchw, (0, 2, 3, 1))
    x = jnp.pad(x, ((0, 0), (padding, padding), (padding, padding), (0, Cp - C)))
    Hp, Wp = x.shape[1], x.shape[2]

    if tile_rows is None:
        tile_rows = _pick_tile_rows(Ho, Wo, stride, KH, dilation, Wp, Cp)
    assert Ho % tile_rows == 0, (Ho, tile_rows)
    assert (tile_rows * Wo) % 8 == 0 or tile_rows == Ho, (tile_rows, Wo)
    TH = tile_rows
    TH_in = (TH - 1) * stride + (KH - 1) * dilation + 1

    # Fold BN (eval mode) into the conv weights; only a bias remains.
    dw_scale, dw_bias = _fold_bn(params["dw_gamma"], params["dw_beta"],
                                 params["dw_mean"], params["dw_var"])
    dww = jnp.transpose(params["dw_weight"][:, 0], (1, 2, 0)).reshape(KH * KW, C)
    dww = dww * dw_scale[None, :]
    dww = jnp.pad(dww, ((0, 0), (0, Cp - C))).reshape(KH * KW, 1, Cp)
    dwb = jnp.pad(dw_bias, (0, Cp - C)).reshape(1, 1, Cp)

    pw_scale, pw_bias = _fold_bn(params["pw_gamma"], params["pw_beta"],
                                 params["pw_mean"], params["pw_var"])
    pww = jnp.transpose(params["pw_weight"][:, :, 0, 0], (1, 0)) * pw_scale[None, :]
    pww = jnp.pad(pww, ((0, Cp - C), (0, Cop - Cout))).astype(jnp.bfloat16)
    pwb = jnp.pad(pw_bias, (0, Cop - Cout)).reshape(1, Cop)

    kernel = functools.partial(
        _dsnet_kernel, KH=KH, KW=KW, stride=stride, dilation=dilation,
        TH=TH, TH_in=TH_in, Wo=Wo, Cp=Cp, Cop=Cop)

    out2d = pl.pallas_call(
        kernel,
        out_shape=jax.ShapeDtypeStruct((N, Ho * Wo, Cop), jnp.float32),
        grid_spec=pltpu.PrefetchScalarGridSpec(
            num_scalar_prefetch=0,
            grid=(N, Ho // TH),
            in_specs=[
                pl.BlockSpec(memory_space=pl.ANY),                  # x stays in HBM
                pl.BlockSpec((KH * KW, 1, Cp), lambda n, h: (0, 0, 0)),
                pl.BlockSpec((1, 1, Cp), lambda n, h: (0, 0, 0)),
                pl.BlockSpec((Cp, Cop), lambda n, h: (0, 0)),
                pl.BlockSpec((1, Cop), lambda n, h: (0, 0)),
            ],
            out_specs=pl.BlockSpec((1, TH * Wo, Cop), lambda n, h: (n, h, 0)),
            scratch_shapes=[
                pltpu.VMEM((2, TH_in, Wp, Cp), jnp.float32),   # double buffer
                pltpu.SemaphoreType.DMA((2,)),
            ],
        ),
        compiler_params=pltpu.CompilerParams(
            # Batch axis is independent -> shard across the two TCs on v7x.
            # Row-tile axis is "arbitrary": the cross-step halo prefetch
            # requires sequential execution within one image.
            dimension_semantics=("parallel", "arbitrary"),
            # Within physical VMEM on all generations (v7x has 64 MiB).
            vmem_limit_bytes=48 * 1024 * 1024,
        ),
    )(x, dww, dwb, pww, pwb)

    out = out2d[:, :, :Cout].reshape(N, Ho, Wo, Cout)
    return jnp.transpose(out, (0, 3, 1, 2))  # back to NCHW


def _reference(x_nchw, params, *, kernel_size, stride, dilation, padding):
    """Pure-JAX f32 reference (lax.conv) for verification."""
    C = x_nchw.shape[1]
    y = lax.conv_general_dilated(
        x_nchw, params["dw_weight"],
        window_strides=(stride, stride),
        padding=[(padding, padding), (padding, padding)],
        rhs_dilation=(dilation, dilation),
        dimension_numbers=("NCHW", "OIHW", "NCHW"),
        feature_group_count=C)
    s, b = _fold_bn(params["dw_gamma"], params["dw_beta"],
                    params["dw_mean"], params["dw_var"])
    y = jnp.maximum(y * s[None, :, None, None] + b[None, :, None, None], 0.0)
    z = lax.conv_general_dilated(
        y, params["pw_weight"],
        window_strides=(1, 1), padding=[(0, 0), (0, 0)],
        dimension_numbers=("NCHW", "OIHW", "NCHW"))
    s, b = _fold_bn(params["pw_gamma"], params["pw_beta"],
                    params["pw_mean"], params["pw_var"])
    return jnp.maximum(z * s[None, :, None, None] + b[None, :, None, None], 0.0)


def _init_params(key, in_channels, out_channels, kernel_size):
    ks = jax.random.split(key, 8)
    C, Cout, K = in_channels, out_channels, kernel_size
    return {
        # depthwise conv: (C, 1, K, K) since groups == in_channels
        "dw_weight": jax.random.normal(ks[0], (C, 1, K, K), jnp.float32) * 0.2,
        "dw_gamma": 1.0 + 0.1 * jax.random.normal(ks[1], (C,), jnp.float32),
        "dw_beta": 0.05 * jax.random.normal(ks[2], (C,), jnp.float32),
        "dw_mean": 0.1 * jax.random.normal(ks[3], (C,), jnp.float32),
        "dw_var": jnp.abs(jax.random.normal(ks[4], (C,), jnp.float32)) + 0.5,
        # pointwise conv: (Cout, C, 1, 1)
        "pw_weight": jax.random.normal(ks[5], (Cout, C, 1, 1), jnp.float32) * 0.2,
        "pw_gamma": 1.0 + 0.1 * jax.random.normal(ks[6], (Cout,), jnp.float32),
        "pw_beta": 0.05 * jax.random.normal(ks[7], (Cout,), jnp.float32),
        "pw_mean": jnp.zeros((Cout,), jnp.float32),
        "pw_var": jnp.ones((Cout,), jnp.float32),
    }


if __name__ == "__main__":
    key = jax.random.PRNGKey(0)
    k_x, k_p = jax.random.split(key)

    N, C, H, W = 2, 4, 16, 16
    Cout = 8
    kernel_size, stride, dilation, padding = 3, 1, 1, 1

    x = jax.random.normal(k_x, (N, C, H, W), jnp.float32)
    params = _init_params(k_p, C, Cout, kernel_size)

    # tile_rows=8 exercises the spatial-tiling + halo prefetch path
    # (2 row-tiles per image -> one real prefetch per image).
    out = dsnet_block(x, params, kernel_size=kernel_size, stride=stride,
                      dilation=dilation, padding=padding, tile_rows=8)
    out = jax.block_until_ready(out)

    ref = _reference(x, params, kernel_size=kernel_size, stride=stride,
                     dilation=dilation, padding=padding)
    assert out.shape == ref.shape, (out.shape, ref.shape)
    # Tolerance loosened vs the f32 reference because the 1x1-conv matmul runs
    # in bf16 on the MXU (expected quantization, f32 accumulation).
    max_err = float(jnp.max(jnp.abs(out - ref)))
    assert jnp.allclose(out, ref, atol=5e-2, rtol=5e-2), max_err

    print("KERNEL_OK")
</pallas_src>

<mosaic_0001>
module attributes {stable_mosaic.version = 11 : i64} {
  func.func @_dsnet_kernel(%arg0: i32, %arg1: i32, %arg2: memref<2x18x18x128xf32, #tpu.memory_space<any>>, %arg3: memref<9x1x128xf32, #tpu.memory_space<vmem>>, %arg4: memref<1x1x128xf32, #tpu.memory_space<vmem>>, %arg5: memref<128x128xbf16, #tpu.memory_space<vmem>>, %arg6: memref<1x128xf32, #tpu.memory_space<vmem>>, %arg7: memref<1x128x128xf32, #tpu.memory_space<vmem>>, %arg8: memref<2x10x18x128xf32, #tpu.memory_space<vmem>>, %arg9: memref<2x!tpu.dma_semaphore, #tpu.memory_space<semaphore_mem>>) attributes {dimension_semantics = [#tpu.dimension_semantics<parallel>, #tpu.dimension_semantics<arbitrary>], iteration_bounds = array<i64: 2, 2>, scalar_prefetch = 0 : i64, scratch_operands = 2 : i64, tpu.core_type = #tpu.core_type<tc>, window_params = [{}, {pipeline_mode = #tpu.pipeline_mode<synchronous>, transform_indices = @transform_1, window_bounds = array<i64: 9, 1, 128>}, {pipeline_mode = #tpu.pipeline_mode<synchronous>, transform_indices = @transform_2, window_bounds = array<i64: 1, 1, 128>}, {pipeline_mode = #tpu.pipeline_mode<synchronous>, transform_indices = @transform_3, window_bounds = array<i64: 128, 128>}, {pipeline_mode = #tpu.pipeline_mode<synchronous>, transform_indices = @transform_4, window_bounds = array<i64: 1, 128>}, {transform_indices = @transform_5, window_bounds = array<i64: 1, 128, 128>}]} {
    %c1_i32 = arith.constant 1 : i32
    %0 = arith.andi %arg1, %c1_i32 : i32
    %c0_i32 = arith.constant 0 : i32
    %1 = arith.cmpi eq, %arg1, %c0_i32 : i32
    %2 = arith.extui %1 : i1 to i32
    %c0_i32_0 = arith.constant 0 : i32
    %3 = arith.cmpi ne, %2, %c0_i32_0 : i32
    scf.if %3 {
      %c0_i32_93 = arith.constant 0 : i32
      %c0_i32_94 = arith.constant 0 : i32
      %c0_i32_95 = arith.constant 0 : i32
      %c0_i32_96 = arith.constant 0 : i32
      %c0_i32_97 = arith.constant 0 : i32
      %111 = tpu.memref_slice %arg2[%arg0, %c0_i32_95, %c0_i32_96, %c0_i32_97] : memref<2x18x18x128xf32, #tpu.memory_space<any>> -> memref<1x10x18x128xf32, #tpu.memory_space<any>>
      %112 = tpu.memref_squeeze %111 : memref<1x10x18x128xf32, #tpu.memory_space<any>> -> memref<10x18x128xf32, #tpu.memory_space<any>>
      %c0_i32_98 = arith.constant 0 : i32
      %c0_i32_99 = arith.constant 0 : i32
      %c0_i32_100 = arith.constant 0 : i32
      %113 = tpu.memref_slice %arg8[%c0_i32_93, %c0_i32_98, %c0_i32_99, %c0_i32_100] : memref<2x10x18x128xf32, #tpu.memory_space<vmem>> -> memref<1x10x18x128xf32, #tpu.memory_space<vmem>>
      %114 = tpu.memref_squeeze %113 : memref<1x10x18x128xf32, #tpu.memory_space<vmem>> -> memref<10x18x128xf32, #tpu.memory_space<vmem>>
      %115 = tpu.memref_slice %arg9[%c0_i32_94] : memref<2x!tpu.dma_semaphore, #tpu.memory_space<semaphore_mem>> -> memref<1x!tpu.dma_semaphore, #tpu.memory_space<semaphore_mem>>
      %116 = tpu.memref_squeeze %115 : memref<1x!tpu.dma_semaphore, #tpu.memory_space<semaphore_mem>> -> memref<!tpu.dma_semaphore, #tpu.memory_space<semaphore_mem>>
      tpu.enqueue_dma source(%112 : memref<10x18x128xf32, #tpu.memory_space<any>>) target(%114 : memref<10x18x128xf32, #tpu.memory_space<vmem>>) target_semaphore(%116 : memref<!tpu.dma_semaphore, #tpu.memory_space<semaphore_mem>>)
    } else {
    }
    %c1_i32_1 = arith.constant 1 : i32
    %4 = arith.addi %arg1, %c1_i32_1 : i32
    %c2_i32 = arith.constant 2 : i32
    %5 = arith.cmpi slt, %4, %c2_i32 : i32
    %6 = arith.extui %5 : i1 to i32
    %c0_i32_2 = arith.constant 0 : i32
    %7 = arith.cmpi ne, %6, %c0_i32_2 : i32
    scf.if %7 {
      %c1_i32_93 = arith.constant 1 : i32
      %111 = arith.addi %arg1, %c1_i32_93 : i32
      %c1_i32_94 = arith.constant 1 : i32
      %112 = arith.addi %arg1, %c1_i32_94 : i32
      %c1_i32_95 = arith.constant 1 : i32
      %113 = arith.andi %112, %c1_i32_95 : i32
      %c8_i32 = arith.constant 8 : i32
      %114 = arith.muli %111, %c8_i32 : i32
      %c0_i32_96 = arith.constant 0 : i32
      %c0_i32_97 = arith.constant 0 : i32
      %115 = tpu.memref_slice %arg2[%arg0, %114, %c0_i32_96, %c0_i32_97] : memref<2x18x18x128xf32, #tpu.memory_space<any>> -> memref<1x10x18x128xf32, #tpu.memory_space<any>>
      %116 = tpu.memref_squeeze %115 : memref<1x10x18x128xf32, #tpu.memory_space<any>> -> memref<10x18x128xf32, #tpu.memory_space<any>>
      %c0_i32_98 = arith.constant 0 : i32
      %c0_i32_99 = arith.constant 0 : i32
      %c0_i32_100 = arith.constant 0 : i32
      %117 = tpu.memref_slice %arg8[%113, %c0_i32_98, %c0_i32_99, %c0_i32_100] : memref<2x10x18x128xf32, #tpu.memory_space<vmem>> -> memref<1x10x18x128xf32, #tpu.memory_space<vmem>>
      %118 = tpu.memref_squeeze %117 : memref<1x10x18x128xf32, #tpu.memory_space<vmem>> -> memref<10x18x128xf32, #tpu.memory_space<vmem>>
      %119 = tpu.memref_slice %arg9[%113] : memref<2x!tpu.dma_semaphore, #tpu.memory_space<semaphore_mem>> -> memref<1x!tpu.dma_semaphore, #tpu.memory_space<semaphore_mem>>
      %120 = tpu.memref_squeeze %119 : memref<1x!tpu.dma_semaphore, #tpu.memory_space<semaphore_mem>> -> memref<!tpu.dma_semaphore, #tpu.memory_space<semaphore_mem>>
      tpu.enqueue_dma source(%116 : memref<10x18x128xf32, #tpu.memory_space<any>>) target(%118 : memref<10x18x128xf32, #tpu.memory_space<vmem>>) target_semaphore(%120 : memref<!tpu.dma_semaphore, #tpu.memory_space<semaphore_mem>>)
    } else {
    }
    %c0_i32_3 = arith.constant 0 : i32
    %c0_i32_4 = arith.constant 0 : i32
    %c0_i32_5 = arith.constant 0 : i32
    %8 = tpu.memref_slice %arg2[%arg0, %c0_i32_3, %c0_i32_4, %c0_i32_5] : memref<2x18x18x128xf32, #tpu.memory_space<any>> -> memref<1x10x18x128xf32, #tpu.memory_space<any>>
    %9 = tpu.memref_squeeze %8 : memref<1x10x18x128xf32, #tpu.memory_space<any>> -> memref<10x18x128xf32, #tpu.memory_space<any>>
    %c0_i32_6 = arith.constant 0 : i32
    %c0_i32_7 = arith.constant 0 : i32
    %c0_i32_8 = arith.constant 0 : i32
    %10 = tpu.memref_slice %arg8[%0, %c0_i32_6, %c0_i32_7, %c0_i32_8] : memref<2x10x18x128xf32, #tpu.memory_space<vmem>> -> memref<1x10x18x128xf32, #tpu.memory_space<vmem>>
    %11 = tpu.memref_squeeze %10 : memref<1x10x18x128xf32, #tpu.memory_space<vmem>> -> memref<10x18x128xf32, #tpu.memory_space<vmem>>
    %12 = tpu.memref_slice %arg9[%0] : memref<2x!tpu.dma_semaphore, #tpu.memory_space<semaphore_mem>> -> memref<1x!tpu.dma_semaphore, #tpu.memory_space<semaphore_mem>>
    %13 = tpu.memref_squeeze %12 : memref<1x!tpu.dma_semaphore, #tpu.memory_space<semaphore_mem>> -> memref<!tpu.dma_semaphore, #tpu.memory_space<semaphore_mem>>
    tpu.wait_dma2 semaphore(%13 : memref<!tpu.dma_semaphore, #tpu.memory_space<semaphore_mem>>) src(%9 : memref<10x18x128xf32, #tpu.memory_space<any>>) dst(%11 : memref<10x18x128xf32, #tpu.memory_space<vmem>>)
    %c0_i32_9 = arith.constant 0 : i32
    %c0_i32_10 = arith.constant 0 : i32
    %c0_i32_11 = arith.constant 0 : i32
    %14 = tpu.memref_slice %arg8[%0, %c0_i32_9, %c0_i32_10, %c0_i32_11] : memref<2x10x18x128xf32, #tpu.memory_space<vmem>> -> memref<1x10x18x128xf32, #tpu.memory_space<vmem>>
    %15 = tpu.memref_squeeze %14 : memref<1x10x18x128xf32, #tpu.memory_space<vmem>> -> memref<10x18x128xf32, #tpu.memory_space<vmem>>
    %c0 = arith.constant 0 : index
    %c0_12 = arith.constant 0 : index
    %c0_13 = arith.constant 0 : index
    %16 = vector.load %15[%c0, %c0_12, %c0_13] : memref<10x18x128xf32, #tpu.memory_space<vmem>>, vector<8x16x128xf32>
    %c0_14 = arith.constant 0 : index
    %c0_15 = arith.constant 0 : index
    %c0_16 = arith.constant 0 : index
    %17 = vector.load %arg3[%c0_14, %c0_15, %c0_16] : memref<9x1x128xf32, #tpu.memory_space<vmem>>, vector<1x1x128xf32>
    %18 = vector.shape_cast %17 : vector<1x1x128xf32> to vector<1x128xf32>
    %19 = vector.shape_cast %18 : vector<1x128xf32> to vector<1x1x128xf32>
    %20 = vector.broadcast %19 : vector<1x1x128xf32> to vector<8x16x128xf32>
    %21 = arith.mulf %16, %20 : vector<8x16x128xf32>
    %c0_i32_17 = arith.constant 0 : i32
    %c0_i32_18 = arith.constant 0 : i32
    %c0_i32_19 = arith.constant 0 : i32
    %22 = tpu.memref_slice %arg8[%0, %c0_i32_17, %c0_i32_18, %c0_i32_19] : memref<2x10x18x128xf32, #tpu.memory_space<vmem>> -> memref<1x10x18x128xf32, #tpu.memory_space<vmem>>
    %23 = tpu.memref_squeeze %22 : memref<1x10x18x128xf32, #tpu.memory_space<vmem>> -> memref<10x18x128xf32, #tpu.memory_space<vmem>>
    %c0_20 = arith.constant 0 : index
    %c1 = arith.constant 1 : index
    %c0_21 = arith.constant 0 : index
    %24 = vector.load %23[%c0_20, %c1, %c0_21] : memref<10x18x128xf32, #tpu.memory_space<vmem>>, vector<8x16x128xf32>
    %c1_22 = arith.constant 1 : index
    %c0_23 = arith.constant 0 : index
    %c0_24 = arith.constant 0 : index
    %25 = vector.load %arg3[%c1_22, %c0_23, %c0_24] : memref<9x1x128xf32, #tpu.memory_space<vmem>>, vector<1x1x128xf32>
    %26 = vector.shape_cast %25 : vector<1x1x128xf32> to vector<1x128xf32>
    %27 = vector.shape_cast %26 : vector<1x128xf32> to vector<1x1x128xf32>
    %28 = vector.broadcast %27 : vector<1x1x128xf32> to vector<8x16x128xf32>
    %29 = arith.mulf %24, %28 : vector<8x16x128xf32>
    %30 = arith.addf %21, %29 : vector<8x16x128xf32>
    %c0_i32_25 = arith.constant 0 : i32
    %c0_i32_26 = arith.constant 0 : i32
    %c0_i32_27 = arith.constant 0 : i32
    %31 = tpu.memref_slice %arg8[%0, %c0_i32_25, %c0_i32_26, %c0_i32_27] : memref<2x10x18x128xf32, #tpu.memory_space<vmem>> -> memref<1x10x18x128xf32, #tpu.memory_space<vmem>>
    %32 = tpu.memref_squeeze %31 : memref<1x10x18x128xf32, #tpu.memory_space<vmem>> -> memref<10x18x128xf32, #tpu.memory_space<vmem>>
    %c0_28 = arith.constant 0 : index
    %c2 = arith.constant 2 : index
    %c0_29 = arith.constant 0 : index
    %33 = vector.load %32[%c0_28, %c2, %c0_29] : memref<10x18x128xf32, #tpu.memory_space<vmem>>, vector<8x16x128xf32>
    %c2_30 = arith.constant 2 : index
    %c0_31 = arith.constant 0 : index
    %c0_32 = arith.constant 0 : index
    %34 = vector.load %arg3[%c2_30, %c0_31, %c0_32] : memref<9x1x128xf32, #tpu.memory_space<vmem>>, vector<1x1x128xf32>
    %35 = vector.shape_cast %34 : vector<1x1x128xf32> to vector<1x128xf32>
    %36 = vector.shape_cast %35 : vector<1x128xf32> to vector<1x1x128xf32>
    %37 = vector.broadcast %36 : vector<1x1x128xf32> to vector<8x16x128xf32>
    %38 = arith.mulf %33, %37 : vector<8x16x128xf32>
    %39 = arith.addf %30, %38 : vector<8x16x128xf32>
    %c0_i32_33 = arith.constant 0 : i32
    %c0_i32_34 = arith.constant 0 : i32
    %c0_i32_35 = arith.constant 0 : i32
    %40 = tpu.memref_slice %arg8[%0, %c0_i32_33, %c0_i32_34, %c0_i32_35] : memref<2x10x18x128xf32, #tpu.memory_space<vmem>> -> memref<1x10x18x128xf32, #tpu.memory_space<vmem>>
    %41 = tpu.memref_squeeze %40 : memref<1x10x18x128xf32, #tpu.memory_space<vmem>> -> memref<10x18x128xf32, #tpu.memory_space<vmem>>
    %c1_36 = arith.constant 1 : index
    %c0_37 = arith.constant 0 : index
    %c0_38 = arith.constant 0 : index
    %42 = vector.load %41[%c1_36, %c0_37, %c0_38] : memref<10x18x128xf32, #tpu.memory_space<vmem>>, vector<8x16x128xf32>
    %c3 = arith.constant 3 : index
    %c0_39 = arith.constant 0 : index
    %c0_40 = arith.constant 0 : index
    %43 = vector.load %arg3[%c3, %c0_39, %c0_40] : memref<9x1x128xf32, #tpu.memory_space<vmem>>, vector<1x1x128xf32>
    %44 = vector.shape_cast %43 : vector<1x1x128xf32> to vector<1x128xf32>
    %45 = vector.shape_cast %44 : vector<1x128xf32> to vector<1x1x128xf32>
    %46 = vector.broadcast %45 : vector<1x1x128xf32> to vector<8x16x128xf32>
    %47 = arith.mulf %42, %46 : vector<8x16x128xf32>
    %48 = arith.addf %39, %47 : vector<8x16x128xf32>
    %c0_i32_41 = arith.constant 0 : i32
    %c0_i32_42 = arith.constant 0 : i32
    %c0_i32_43 = arith.constant 0 : i32
    %49 = tpu.memref_slice %arg8[%0, %c0_i32_41, %c0_i32_42, %c0_i32_43] : memref<2x10x18x128xf32, #tpu.memory_space<vmem>> -> memref<1x10x18x128xf32, #tpu.memory_space<vmem>>
    %50 = tpu.memref_squeeze %49 : memref<1x10x18x128xf32, #tpu.memory_space<vmem>> -> memref<10x18x128xf32, #tpu.memory_space<vmem>>
    %c1_44 = arith.constant 1 : index
    %c1_45 = arith.constant 1 : index
    %c0_46 = arith.constant 0 : index
    %51 = vector.load %50[%c1_44, %c1_45, %c0_46] : memref<10x18x128xf32, #tpu.memory_space<vmem>>, vector<8x16x128xf32>
    %c4 = arith.constant 4 : index
    %c0_47 = arith.constant 0 : index
    %c0_48 = arith.constant 0 : index
    %52 = vector.load %arg3[%c4, %c0_47, %c0_48] : memref<9x1x128xf32, #tpu.memory_space<vmem>>, vector<1x1x128xf32>
    %53 = vector.shape_cast %52 : vector<1x1x128xf32> to vector<1x128xf32>
    %54 = vector.shape_cast %53 : vector<1x128xf32> to vector<1x1x128xf32>
    %55 = vector.broadcast %54 : vector<1x1x128xf32> to vector<8x16x128xf32>
    %56 = arith.mulf %51, %55 : vector<8x16x128xf32>
    %57 = arith.addf %48, %56 : vector<8x16x128xf32>
    %c0_i32_49 = arith.constant 0 : i32
    %c0_i32_50 = arith.constant 0 : i32
    %c0_i32_51 = arith.constant 0 : i32
    %58 = tpu.memref_slice %arg8[%0, %c0_i32_49, %c0_i32_50, %c0_i32_51] : memref<2x10x18x128xf32, #tpu.memory_space<vmem>> -> memref<1x10x18x128xf32, #tpu.memory_space<vmem>>
    %59 = tpu.memref_squeeze %58 : memref<1x10x18x128xf32, #tpu.memory_space<vmem>> -> memref<10x18x128xf32, #tpu.memory_space<vmem>>
    %c1_52 = arith.constant 1 : index
    %c2_53 = arith.constant 2 : index
    %c0_54 = arith.constant 0 : index
    %60 = vector.load %59[%c1_52, %c2_53, %c0_54] : memref<10x18x128xf32, #tpu.memory_space<vmem>>, vector<8x16x128xf32>
    %c5 = arith.constant 5 : index
    %c0_55 = arith.constant 0 : index
    %c0_56 = arith.constant 0 : index
    %61 = vector.load %arg3[%c5, %c0_55, %c0_56] : memref<9x1x128xf32, #tpu.memory_space<vmem>>, vector<1x1x128xf32>
    %62 = vector.shape_cast %61 : vector<1x1x128xf32> to vector<1x128xf32>
    %63 = vector.shape_cast %62 : vector<1x128xf32> to vector<1x1x128xf32>
    %64 = vector.broadcast %63 : vector<1x1x128xf32> to vector<8x16x128xf32>
    %65 = arith.mulf %60, %64 : vector<8x16x128xf32>
    %66 = arith.addf %57, %65 : vector<8x16x128xf32>
    %c0_i32_57 = arith.constant 0 : i32
    %c0_i32_58 = arith.constant 0 : i32
    %c0_i32_59 = arith.constant 0 : i32
    %67 = tpu.memref_slice %arg8[%0, %c0_i32_57, %c0_i32_58, %c0_i32_59] : memref<2x10x18x128xf32, #tpu.memory_space<vmem>> -> memref<1x10x18x128xf32, #tpu.memory_space<vmem>>
    %68 = tpu.memref_squeeze %67 : memref<1x10x18x128xf32, #tpu.memory_space<vmem>> -> memref<10x18x128xf32, #tpu.memory_space<vmem>>
    %c2_60 = arith.constant 2 : index
    %c0_61 = arith.constant 0 : index
    %c0_62 = arith.constant 0 : index
    %69 = vector.load %68[%c2_60, %c0_61, %c0_62] : memref<10x18x128xf32, #tpu.memory_space<vmem>>, vector<8x16x128xf32>
    %c6 = arith.constant 6 : index
    %c0_63 = arith.constant 0 : index
    %c0_64 = arith.constant 0 : index
    %70 = vector.load %arg3[%c6, %c0_63, %c0_64] : memref<9x1x128xf32, #tpu.memory_space<vmem>>, vector<1x1x128xf32>
    %71 = vector.shape_cast %70 : vector<1x1x128xf32> to vector<1x128xf32>
    %72 = vector.shape_cast %71 : vector<1x128xf32> to vector<1x1x128xf32>
    %73 = vector.broadcast %72 : vector<1x1x128xf32> to vector<8x16x128xf32>
    %74 = arith.mulf %69, %73 : vector<8x16x128xf32>
    %75 = arith.addf %66, %74 : vector<8x16x128xf32>
    %c0_i32_65 = arith.constant 0 : i32
    %c0_i32_66 = arith.constant 0 : i32
    %c0_i32_67 = arith.constant 0 : i32
    %76 = tpu.memref_slice %arg8[%0, %c0_i32_65, %c0_i32_66, %c0_i32_67] : memref<2x10x18x128xf32, #tpu.memory_space<vmem>> -> memref<1x10x18x128xf32, #tpu.memory_space<vmem>>
    %77 = tpu.memref_squeeze %76 : memref<1x10x18x128xf32, #tpu.memory_space<vmem>> -> memref<10x18x128xf32, #tpu.memory_space<vmem>>
    %c2_68 = arith.constant 2 : index
    %c1_69 = arith.constant 1 : index
    %c0_70 = arith.constant 0 : index
    %78 = vector.load %77[%c2_68, %c1_69, %c0_70] : memref<10x18x128xf32, #tpu.memory_space<vmem>>, vector<8x16x128xf32>
    %c7 = arith.constant 7 : index
    %c0_71 = arith.constant 0 : index
    %c0_72 = arith.constant 0 : index
    %79 = vector.load %arg3[%c7, %c0_71, %c0_72] : memref<9x1x128xf32, #tpu.memory_space<vmem>>, vector<1x1x128xf32>
    %80 = vector.shape_cast %79 : vector<1x1x128xf32> to vector<1x128xf32>
    %81 = vector.shape_cast %80 : vector<1x128xf32> to vector<1x1x128xf32>
    %82 = vector.broadcast %81 : vector<1x1x128xf32> to vector<8x16x128xf32>
    %83 = arith.mulf %78, %82 : vector<8x16x128xf32>
    %84 = arith.addf %75, %83 : vector<8x16x128xf32>
    %c0_i32_73 = arith.constant 0 : i32
    %c0_i32_74 = arith.constant 0 : i32
    %c0_i32_75 = arith.constant 0 : i32
    %85 = tpu.memref_slice %arg8[%0, %c0_i32_73, %c0_i32_74, %c0_i32_75] : memref<2x10x18x128xf32, #tpu.memory_space<vmem>> -> memref<1x10x18x128xf32, #tpu.memory_space<vmem>>
    %86 = tpu.memref_squeeze %85 : memref<1x10x18x128xf32, #tpu.memory_space<vmem>> -> memref<10x18x128xf32, #tpu.memory_space<vmem>>
    %c2_76 = arith.constant 2 : index
    %c2_77 = arith.constant 2 : index
    %c0_78 = arith.constant 0 : index
    %87 = vector.load %86[%c2_76, %c2_77, %c0_78] : memref<10x18x128xf32, #tpu.memory_space<vmem>>, vector<8x16x128xf32>
    %c8 = arith.constant 8 : index
    %c0_79 = arith.constant 0 : index
    %c0_80 = arith.constant 0 : index
    %88 = vector.load %arg3[%c8, %c0_79, %c0_80] : memref<9x1x128xf32, #tpu.memory_space<vmem>>, vector<1x1x128xf32>
    %89 = vector.shape_cast %88 : vector<1x1x128xf32> to vector<1x128xf32>
    %90 = vector.shape_cast %89 : vector<1x128xf32> to vector<1x1x128xf32>
    %91 = vector.broadcast %90 : vector<1x1x128xf32> to vector<8x16x128xf32>
    %92 = arith.mulf %87, %91 : vector<8x16x128xf32>
    %93 = arith.addf %84, %92 : vector<8x16x128xf32>
    %c0_81 = arith.constant 0 : index
    %c0_82 = arith.constant 0 : index
    %c0_83 = arith.constant 0 : index
    %94 = vector.load %arg4[%c0_81, %c0_82, %c0_83] : memref<1x1x128xf32, #tpu.memory_space<vmem>>, vector<1x1x128xf32>
    %95 = vector.broadcast %94 : vector<1x1x128xf32> to vector<8x16x128xf32>
    %96 = arith.addf %93, %95 : vector<8x16x128xf32>
    %cst = arith.constant 0.000000e+00 : f32
    %97 = vector.broadcast %cst : f32 to vector<8x16x128xf32>
    %98 = arith.maximumf %96, %97 : vector<8x16x128xf32>
    %99 = vector.shape_cast %98 : vector<8x16x128xf32> to vector<128x128xf32>
    %100 = arith.truncf %99 : vector<128x128xf32> to vector<128x128xbf16>
    %c0_84 = arith.constant 0 : index
    %c0_85 = arith.constant 0 : index
    %101 = vector.load %arg5[%c0_84, %c0_85] : memref<128x128xbf16, #tpu.memory_space<vmem>>, vector<128x128xbf16>
    %cst_86 = arith.constant dense<0.000000e+00> : vector<128x128xf32>
    %102 = tpu.matmul %100, %101, %cst_86 {dimension_numbers = #tpu.dot_dimension_numbers<[1], [0], [0], [1], [0, 0, 1, 1], [], []>} : vector<128x128xbf16>, vector<128x128xbf16>, vector<128x128xf32> -> vector<128x128xf32>
    %c0_87 = arith.constant 0 : index
    %c0_88 = arith.constant 0 : index
    %103 = vector.load %arg6[%c0_87, %c0_88] : memref<1x128xf32, #tpu.memory_space<vmem>>, vector<1x128xf32>
    %104 = vector.broadcast %103 : vector<1x128xf32> to vector<128x128xf32>
    %105 = arith.addf %102, %104 : vector<128x128xf32>
    %cst_89 = arith.constant 0.000000e+00 : f32
    %106 = vector.broadcast %cst_89 : f32 to vector<128x128xf32>
    %107 = arith.maximumf %105, %106 : vector<128x128xf32>
    %c0_90 = arith.constant 0 : index
    %c0_91 = arith.constant 0 : index
    %c0_92 = arith.constant 0 : index
    %108 = vector.load %arg7[%c0_90, %c0_91, %c0_92] : memref<1x128x128xf32, #tpu.memory_space<vmem>>, vector<1x128x128xf32>
    %109 = vector.shape_cast %108 : vector<1x128x128xf32> to vector<128x128xf32>
    %110 = vector.shape_cast %107 : vector<128x128xf32> to vector<1x128x128xf32>
    tpu.vector_store %arg7[%c0_90, %c0_91, %c0_92], %110 {strides = array<i32>} : memref<1x128x128xf32, #tpu.memory_space<vmem>>, vector<1x128x128xf32>,
    return
  }
  func.func @transform_1(%arg0: i32, %arg1: i32) -> (i32, i32, i32) {
    %c0_i32 = arith.constant 0 : i32
    %c0_i32_0 = arith.constant 0 : i32
    %c0_i32_1 = arith.constant 0 : i32
    %c0_i32_2 = arith.constant 0 : i32
    return %c0_i32, %c0_i32_0, %c0_i32_1 : i32, i32, i32
  }
  func.func @transform_2(%arg0: i32, %arg1: i32) -> (i32, i32, i32) {
    %c0_i32 = arith.constant 0 : i32
    %c0_i32_0 = arith.constant 0 : i32
    %c0_i32_1 = arith.constant 0 : i32
    %c0_i32_2 = arith.constant 0 : i32
    return %c0_i32, %c0_i32_0, %c0_i32_1 : i32, i32, i32
  }
  func.func @transform_3(%arg0: i32, %arg1: i32) -> (i32, i32) {
    %c0_i32 = arith.constant 0 : i32
    %c0_i32_0 = arith.constant 0 : i32
    %c0_i32_1 = arith.constant 0 : i32
    return %c0_i32, %c0_i32_0 : i32, i32
  }
  func.func @transform_4(%arg0: i32, %arg1: i32) -> (i32, i32) {
    %c0_i32 = arith.constant 0 : i32
    %c0_i32_0 = arith.constant 0 : i32
    %c0_i32_1 = arith.constant 0 : i32
    return %c0_i32, %c0_i32_0 : i32, i32
  }
  func.func @transform_5(%arg0: i32, %arg1: i32) -> (i32, i32, i32) {
    %c0_i32 = arith.constant 0 : i32
    %c0_i32_0 = arith.constant 0 : i32
    return %arg0, %arg1, %c0_i32 : i32, i32, i32
  }
}

</mosaic_0001>

<llo_original>
// kernel: tpu_custom_call.1
$region0: #{tpu_custom_call.1}
  #allocation0 [shape = 'u32[]', space=smem, size = 0x4, offset = 0x4, fixed_abs, tag = 'smem constant byte address 0x4 - core index']
  #allocation1 [shape = 'u32[72,128]{1,0:T(1,128)}', space=vmem, size = 0x9000, scoped, tag = 'internal scratch']
  #allocation2 [shape = 'f32[2,10,18,128]{3,2,1,0:T(8,128)}', space=vmem, size = 0x3c000, scoped, tag = 'scratch operand']
  #allocation3 [shape = 's32[2]{0}', space=sflag, size = 0x8, scoped, tag = 'scratch operand']
  #allocation6 [shape = 's32[]', space=sflag, size = 0x4, offset = 0, fixed_abs, tag = 'sflag constant byte address 0x0 - dummy sync flag']
  #allocation7 [shape = 's32[]', space=sflag, size = 0x4, offset = 0, fixed_abs, tag = 'sflag constant byte address 0x0 - dummy sync flag']
  %s0 = inlined_call_operand.vmem [shape: f32[2,18,18,128], index: 0, kind: input, shape index: {}]
  %s1 = inlined_call_operand.vmem [shape: f32[9,1,128], index: 1, kind: input, shape index: {}]
  %s2 = inlined_call_operand.vmem [shape: f32[1,1,128], index: 2, kind: input, shape index: {}]
  %s3 = inlined_call_operand.vmem [shape: bf16[128,128], index: 3, kind: input, shape index: {}]
  %s4 = inlined_call_operand.vmem [shape: f32[1,128], index: 4, kind: input, shape index: {}]
  %s5 = inlined_call_operand.hbm [shape: f32[2,256,128], index: 5, kind: output, shape index: {}]
  %s6 = sld [smem:[#allocation0]]
  $region101: #{tpu_custom_call.1} parent=0
    _
  %s8 = ssub.s32 1, %s6
  %s9 = scalar_select 0, %s8, %s6
  $region1: #{tpu_custom_call.1} parent=0
    #allocation4 [shape = 'u8[131072]{0}', space=vmem, size = 0x20000, scoped, tag = 'output window, operand 0']
    #allocation5 [shape = 's32[2]{0}', space=sflag, size = 0x8, scoped, tag = 'scoped memory for tpu_custom_call.1']
    %10 = vsyncpa [#allocation5], 0
    %s11 = scalar_lea.sflag [#allocation5], 1
    %12 = vsyncpa %s11, 0
    loop: start=0, step=1, limit=6
    $region2: #{tpu_custom_call.1} parent=1 // loop_pre_header
      _
    $region3: #{tpu_custom_call.1} parent=1 // loop_header
      %s14 = sphi 0, %s18
      %p15 = scmp.ge.s32.totalorder %s14, 6
      %s21 = sphi 0, %s33
      %s22 = sphi 0, %s29
      %s23 = sphi 0, %s21
      %s24 = sphi 0, %s22
      %s25 = sphi 0, %s23
      %s26 = sphi 0, %s24
      %s34 = sphi 0, %s34
      %s36 = sphi 0, %s34
      %s37 = sphi 0, %s36
      %s51 = sphi 0, %s37
      %s55 = sphi 0, %s55
      %s57 = sphi 0, %s55
      %s58 = sphi 0, %s57
      %s72 = sphi 0, %s58
      %s76 = sphi 0, %s76
      %s78 = sphi 0, %s76
      %s79 = sphi 0, %s78
      %s93 = sphi 0, %s79
      %s97 = sphi 0, %s97
      %s99 = sphi 0, %s97
      %s100 = sphi 0, %s99
      %s114 = sphi 0, %s100
      %s122 = sphi 0, %s124
      %s125 = sphi 0, %s122
      %s126 = sphi 0, %s125
      %s142 = sphi 0, %s126
    $region4: #{tpu_custom_call.1} parent=1 // loop_header_branch
      %17 = sbr.rel (%p15) target = $region8
    $region5: #{tpu_custom_call.1} parent=1 // loop_body
      %s19 = ssub.s32 %s14, 1
      %s20 = ssub.s32 %s14, 2
      %s27 = sadd.s32 1, %s22
      %p28 = scmp.ge.s32.totalorder %s27, 2
      %s29 = scalar_select %p28, 0, %s27
      %s30 = sadd.s32 1, %s21
      %s31 = scalar_select %p28, %s30, %s21
      %p32 = scmp.ge.s32.totalorder %s31, 2
      %s33 = scalar_select %p32, 0, %s31
      %s35 = sadd.s32 %s34, 1
      %p38 = scmp.eq.s32.totalorder %s14, 3
      %p39 = scmp.ne.s32.totalorder %s34, %s36
      %p40 = scmp.eq.s32.totalorder %s14, 0
      %p41 = por %p39, %p40
      %p42 = scmp.ne.s32.totalorder %s34, %s36
      %p43 = scmp.eq.s32.totalorder %s19, 3
      %p44 = por %p42, %p43
      %p45 = scmp.ne.s32.totalorder %s36, %s37
      %p46 = scmp.eq.s32.totalorder %s19, 0
      %p47 = por %p45, %p46
      %p48 = scmp.ne.s32.totalorder %s36, %s37
      %p49 = scmp.eq.s32.totalorder %s20, 3
      %p50 = por %p48, %p49
      %p52 = scmp.ne.s32.totalorder %s37, %s51
      %p53 = scmp.eq.s32.totalorder %s20, 0
      %p54 = por %p52, %p53
      %s56 = sadd.s32 %s55, 1
      %p59 = scmp.eq.s32.totalorder %s14, 3
      %p60 = scmp.ne.s32.totalorder %s55, %s57
      %p61 = scmp.eq.s32.totalorder %s14, 0
      %p62 = por %p60, %p61
      %p63 = scmp.ne.s32.totalorder %s55, %s57
      %p64 = scmp.eq.s32.totalorder %s19, 3
      %p65 = por %p63, %p64
      %p66 = scmp.ne.s32.totalorder %s57, %s58
      %p67 = scmp.eq.s32.totalorder %s19, 0
      %p68 = por %p66, %p67
      %p69 = scmp.ne.s32.totalorder %s57, %s58
      %p70 = scmp.eq.s32.totalorder %s20, 3
      %p71 = por %p69, %p70
      %p73 = scmp.ne.s32.totalorder %s58, %s72
      %p74 = scmp.eq.s32.totalorder %s20, 0
      %p75 = por %p73, %p74
      %s77 = sadd.s32 %s76, 1
      %p80 = scmp.eq.s32.totalorder %s14, 3
      %p81 = scmp.ne.s32.totalorder %s76, %s78
      %p82 = scmp.eq.s32.totalorder %s14, 0
      %p83 = por %p81, %p82
      %p84 = scmp.ne.s32.totalorder %s76, %s78
      %p85 = scmp.eq.s32.totalorder %s19, 3
      %p86 = por %p84, %p85
      %p87 = scmp.ne.s32.totalorder %s78, %s79
      %p88 = scmp.eq.s32.totalorder %s19, 0
      %p89 = por %p87, %p88
      %p90 = scmp.ne.s32.totalorder %s78, %s79
      %p91 = scmp.eq.s32.totalorder %s20, 3
      %p92 = por %p90, %p91
      %p94 = scmp.ne.s32.totalorder %s79, %s93
      %p95 = scmp.eq.s32.totalorder %s20, 0
      %p96 = por %p94, %p95
      %s98 = sadd.s32 %s97, 1
      %p101 = scmp.eq.s32.totalorder %s14, 3
      %p102 = scmp.ne.s32.totalorder %s97, %s99
      %p103 = scmp.eq.s32.totalorder %s14, 0
      %p104 = por %p102, %p103
      %p105 = scmp.ne.s32.totalorder %s97, %s99
      %p106 = scmp.eq.s32.totalorder %s19, 3
      %p107 = por %p105, %p106
      %p108 = scmp.ne.s32.totalorder %s99, %s100
      %p109 = scmp.eq.s32.totalorder %s19, 0
      %p110 = por %p108, %p109
      %p111 = scmp.ne.s32.totalorder %s99, %s100
      %p112 = scmp.eq.s32.totalorder %s20, 3
      %p113 = por %p111, %p112
      %p115 = scmp.ne.s32.totalorder %s100, %s114
      %p116 = scmp.eq.s32.totalorder %s20, 0
      %p117 = por %p115, %p116
      %s118 = ssub.s32 %s21, %s33
      %s119 = ssub.s32 %s22, %s29
      %s120 = sor.u32 %s118, %s119
      %p121 = scmp.eq.s32.totalorder %s120, 0
      %s123 = sadd.s32 %s122, 1
      %s124 = scalar_select %p121, %s122, %s123
      %p127 = pneg %p121
      %p128 = scmp.eq.s32.totalorder %s14, 3
      %p129 = por %p127, %p128
      %p130 = scmp.ne.s32.totalorder %s122, %s125
      %p131 = scmp.eq.s32.totalorder %s14, 0
      %p132 = por %p130, %p131
      %p133 = scmp.ne.s32.totalorder %s122, %s125
      %p134 = scmp.eq.s32.totalorder %s19, 3
      %p135 = por %p133, %p134
      %p136 = scmp.ne.s32.totalorder %s125, %s126
      %p137 = scmp.eq.s32.totalorder %s19, 0
      %p138 = por %p136, %p137
      %p139 = scmp.ne.s32.totalorder %s125, %s126
      %p140 = scmp.eq.s32.totalorder %s20, 3
      %p141 = por %p139, %p140
      %p143 = scmp.ne.s32.totalorder %s126, %s142
      %p144 = scmp.eq.s32.totalorder %s20, 0
      %p145 = por %p143, %p144
      %p146 = scmp.le.s32.totalorder 1, %s14
      %p147 = scmp.lt.s32.totalorder %s14, 5
      %p148 = pnand %p146, %p147
      %p149 = pneg %p148
      // Predicated region
      $region9: #{tpu_custom_call.1} parent=5 // pred_check
        _
      $region10: #{tpu_custom_call.1} parent=5 // pred_check_branch
        %151 = sbr.rel (%p148) target = $region12
      $region11: #{tpu_custom_call.1} parent=5 // pred_region
        %s152 = ssub.s32 %s14, 1
        // Predicated region
        $region13: #{tpu_custom_call.1} parent=11 // pred_check
          %p153 = pneg %p47
        $region14: #{tpu_custom_call.1} parent=11 // pred_check_branch
          %155 = sbr.rel (%p153) target = $region16
        $region15: #{tpu_custom_call.1} parent=11 // pred_region
          _
        $region16: #{tpu_custom_call.1} parent=11 // pred_fallthru
          _
        // Predicated region
        $region17: #{tpu_custom_call.1} parent=11 // pred_check
          %p156 = pneg %p68
        $region18: #{tpu_custom_call.1} parent=11 // pred_check_branch
          %158 = sbr.rel (%p156) target = $region20
        $region19: #{tpu_custom_call.1} parent=11 // pred_region
          _
        $region20: #{tpu_custom_call.1} parent=11 // pred_fallthru
          _
        // Predicated region
        $region21: #{tpu_custom_call.1} parent=11 // pred_check
          %p159 = pneg %p89
        $region22: #{tpu_custom_call.1} parent=11 // pred_check_branch
          %161 = sbr.rel (%p159) target = $region24
        $region23: #{tpu_custom_call.1} parent=11 // pred_region
          _
        $region24: #{tpu_custom_call.1} parent=11 // pred_fallthru
          _
        // Predicated region
        $region25: #{tpu_custom_call.1} parent=11 // pred_check
          %p162 = pneg %p110
        $region26: #{tpu_custom_call.1} parent=11 // pred_check_branch
          %164 = sbr.rel (%p162) target = $region28
        $region27: #{tpu_custom_call.1} parent=11 // pred_region
          _
        $region28: #{tpu_custom_call.1} parent=11 // pred_fallthru
          _
      $region12: #{tpu_custom_call.1} parent=5 // pred_fallthru
        _
      %p165 = scmp.lt.s32.totalorder %s14, 4
      // Predicated region
      $region29: #{tpu_custom_call.1} parent=5 // pred_check
        %p166 = pneg %p165
      $region30: #{tpu_custom_call.1} parent=5 // pred_check_branch
        %168 = sbr.rel (%p166) target = $region32
      $region31: #{tpu_custom_call.1} parent=5 // pred_region
        _
      $region32: #{tpu_custom_call.1} parent=5 // pred_fallthru
        _
      %p169 = scmp.le.s32.totalorder 1, %s14
      %p170 = scmp.lt.s32.totalorder %s14, 5
      %p171 = pnand %p169, %p170
      %p172 = pneg %p171
      // Predicated region
      $region33: #{tpu_custom_call.1} parent=5 // pred_check
        _
      $region34: #{tpu_custom_call.1} parent=5 // pred_check_branch
        %174 = sbr.rel (%p171) target = $region36
      $region35: #{tpu_custom_call.1} parent=5 // pred_region
        %s175 = ssub.s32 %s14, 1
        %p176 = pneg %p47
        %p177 = pneg %p44
        %p178 = pneg %p68
        %p179 = pneg %p65
        %p180 = pneg %p89
        %p181 = pneg %p86
        %p182 = pneg %p110
        %p183 = pneg %p107
        %p184 = pneg %p138
        %p185 = pneg %p135
        %s186 = sand.u32 %s125, 1
        %s187 = scalar_lea.sflag [#allocation5], %s186
        %s188 = sand.u32 %s125, 1
        %s189 = smul.addr %s188, 128
        %s190 = scalar_lea.vmem [#allocation4], %s189
        %s191 = smul.u32 16, %s24
        %s192 = sand.u32 %s24, 1
        %p193 = scmp.eq.s32.totalorder %s24, 0
        // Predicated region
        $region37: #{tpu_custom_call.1} parent=35 // pred_check
          %p194 = pneg %p193
        $region38: #{tpu_custom_call.1} parent=35 // pred_check_branch
          %196 = sbr.rel (%p194) target = $region40
        $region39: #{tpu_custom_call.1} parent=35 // pred_region
          %s197 = smul.u32 %s23, 432
          %s198 = scalar_lea.vmem %s0, %s197
          // Predicated region
          $region41: #{tpu_custom_call.1} parent=39 // pred_check
            _
          $region42: #{tpu_custom_call.1} parent=39 // pred_check_branch
            %200 = sbr.rel (0) target = $region44
          $region43: #{tpu_custom_call.1} parent=39 // pred_region
            %s201 = scalar_lea.vmem %s198, 16
            %s202 = scalar_lea.vmem [#allocation2], 16
            loop: start=0, step=1, limit=1
            $region45: #{tpu_custom_call.1} parent=43 // loop_pre_header
              _
            $region46: #{tpu_custom_call.1} parent=43 // loop_header
              %s204 = sphi 0, %s208
              %p205 = scmp.ge.s32.totalorder %s204, 1
              %s209 = sphi %s198, %s198
              %s210 = sphi [#allocation2], [#allocation2]
            $region47: #{tpu_custom_call.1} parent=43 // loop_header_branch
              %207 = sbr.rel (%p205) target = $region51
            $region48: #{tpu_custom_call.1} parent=43 // loop_body
              %v211 = vld [vmem:[%s209] sm:$0xff]
              %212 = vst [vmem:[%s210] sm:$0xff] %v211
              %v213 = vld [vmem:[%s209 + $0x8] sm:$0xff]
              %214 = vst [vmem:[%s210 + $0x8] sm:$0xff] %v213
              %v215 = vld [vmem:[%s209 + $0x18] sm:$0xff]
              %216 = vst [vmem:[%s210 + $0x18] sm:$0xff] %v215
              %v217 = vld [vmem:[%s209 + $0x20] sm:$0xff]
              %218 = vst [vmem:[%s210 + $0x20] sm:$0xff] %v217
              %v219 = vld [vmem:[%s209 + $0x30] sm:$0xff]
              %220 = vst [vmem:[%s210 + $0x30] sm:$0xff] %v219
              %v221 = vld [vmem:[%s209 + $0x38] sm:$0xff]
              %222 = vst [vmem:[%s210 + $0x38] sm:$0xff] %v221
              %v223 = vld [vmem:[%s209 + $0x48] sm:$0xff]
              %224 = vst [vmem:[%s210 + $0x48] sm:$0xff] %v223
              %v225 = vld [vmem:[%s209 + $0x50] sm:$0xff]
              %226 = vst [vmem:[%s210 + $0x50] sm:$0xff] %v225
              %v227 = vld [vmem:[%s209 + $0x60] sm:$0xff]
              %228 = vst [vmem:[%s210 + $0x60] sm:$0xff] %v227
              %v229 = vld [vmem:[%s209 + $0x68] sm:$0xff]
              %230 = vst [vmem:[%s210 + $0x68] sm:$0xff] %v229
              %v231 = vld [vmem:[%s209 + $0x78] sm:$0xff]
              %232 = vst [vmem:[%s210 + $0x78] sm:$0xff] %v231
              %v233 = vld [vmem:[%s209 + $0x80] sm:$0xff]
              %234 = vst [vmem:[%s210 + $0x80] sm:$0xff] %v233
              %v235 = vld [vmem:[%s209 + $0x90] sm:$0xff]
              %236 = vst [vmem:[%s210 + $0x90] sm:$0xff] %v235
              %v237 = vld [vmem:[%s209 + $0x98] sm:$0xff]
              %238 = vst [vmem:[%s210 + $0x98] sm:$0xff] %v237
              %v239 = vld [vmem:[%s209 + $0xa8] sm:$0xff]
              %240 = vst [vmem:[%s210 + $0xa8] sm:$0xff] %v239
              %v241 = vld [vmem:[%s209 + $0xb0] sm:$0xff]
              %242 = vst [vmem:[%s210 + $0xb0] sm:$0xff] %v241
              %v243 = vld [vmem:[%s209 + $0xc0] sm:$0xff]
              %244 = vst [vmem:[%s210 + $0xc0] sm:$0xff] %v243
              %v245 = vld [vmem:[%s209 + $0xc8] sm:$0xff]
              %246 = vst [vmem:[%s210 + $0xc8] sm:$0xff] %v245
              %v247 = vld [vmem:[%s209 + $0xd8] sm:$0xff]
              %248 = vst [vmem:[%s210 + $0xd8] sm:$0xff] %v247
              %v249 = vld [vmem:[%s209 + $0xe0] sm:$0xff]
              %250 = vst [vmem:[%s210 + $0xe0] sm:$0xff] %v249
            $region49: #{tpu_custom_call.1} parent=43 // loop_footer
              %s208 = sadd.s32 1, %s204
            $region50: #{tpu_custom_call.1} parent=43 // loop_footer_branch
              %203 = sbr.rel target = $region46
            $region51: #{tpu_custom_call.1} parent=43 // loop_exit
              _
            %s252 = ssub.s32 4, 1
            loop: start=0, step=1, limit=1
            $region52: #{tpu_custom_call.1} parent=43 // loop_pre_header
              _
            $region53: #{tpu_custom_call.1} parent=43 // loop_header
              %s254 = sphi 0, %s258
              %p255 = scmp.ge.s32.totalorder %s254, 1
              %s259 = sphi %s201, %s201
              %s260 = sphi %s202, %s202
            $region54: #{tpu_custom_call.1} parent=43 // loop_header_branch
              %257 = sbr.rel (%p255) target = $region58
            $region55: #{tpu_custom_call.1} parent=43 // loop_body
              %v261 = vld [vmem:[%s259] sm:%s252]
              %262 = vst [vmem:[%s260] sm:%s252] %v261
              %v263 = vld [vmem:[%s259 + $0x18] sm:%s252]
              %264 = vst [vmem:[%s260 + $0x18] sm:%s252] %v263
              %v265 = vld [vmem:[%s259 + $0x30] sm:%s252]
              %266 = vst [vmem:[%s260 + $0x30] sm:%s252] %v265
              %v267 = vld [vmem:[%s259 + $0x48] sm:%s252]
              %268 = vst [vmem:[%s260 + $0x48] sm:%s252] %v267
              %v269 = vld [vmem:[%s259 + $0x60] sm:%s252]
              %270 = vst [vmem:[%s260 + $0x60] sm:%s252] %v269
              %v271 = vld [vmem:[%s259 + $0x78] sm:%s252]
              %272 = vst [vmem:[%s260 + $0x78] sm:%s252] %v271
              %v273 = vld [vmem:[%s259 + $0x90] sm:%s252]
              %274 = vst [vmem:[%s260 + $0x90] sm:%s252] %v273
              %v275 = vld [vmem:[%s259 + $0xa8] sm:%s252]
              %276 = vst [vmem:[%s260 + $0xa8] sm:%s252] %v275
              %v277 = vld [vmem:[%s259 + $0xc0] sm:%s252]
              %278 = vst [vmem:[%s260 + $0xc0] sm:%s252] %v277
              %v279 = vld [vmem:[%s259 + $0xd8] sm:%s252]
              %280 = vst [vmem:[%s260 + $0xd8] sm:%s252] %v279
            $region56: #{tpu_custom_call.1} parent=43 // loop_footer
              %s258 = sadd.s32 1, %s254
            $region57: #{tpu_custom_call.1} parent=43 // loop_footer_branch
              %253 = sbr.rel target = $region53
            $region58: #{tpu_custom_call.1} parent=43 // loop_exit
              _
          $region44: #{tpu_custom_call.1} parent=39 // pred_fallthru
            _
          // Predicated region
          $region59: #{tpu_custom_call.1} parent=39 // pred_check
            _
          $region60: #{tpu_custom_call.1} parent=39 // pred_check_branch
            %283 = sbr.rel (0) target = $region62
          $region61: #{tpu_custom_call.1} parent=39 // pred_region
            %284 = vsyncadd [#allocation3], 2880
          $region62: #{tpu_custom_call.1} parent=39 // pred_fallthru
            _
        $region40: #{tpu_custom_call.1} parent=35 // pred_fallthru
          _
        %s285 = sadd.s32 %s24, 1
        %p286 = scmp.lt.s32.totalorder %s285, 2
        // Predicated region
        $region63: #{tpu_custom_call.1} parent=35 // pred_check
          %p287 = pneg %p286
        $region64: #{tpu_custom_call.1} parent=35 // pred_check_branch
          %289 = sbr.rel (%p287) target = $region66
        $region65: #{tpu_custom_call.1} parent=35 // pred_region
          %s290 = sand.u32 %s285, 1
          %s291 = smul.u32 %s285, 8
          %s292 = smul.u32 %s291, 24
          %s293 = smul.u32 %s23, 432
          %s294 = sadd.s32 %s292, %s293
          %s295 = scalar_lea.vmem %s0, %s294
          %s296 = smul.u32 %s290, 240
          %s297 = scalar_lea.vmem [#allocation2], %s296
          %s298 = scalar_lea.sflag [#allocation3], %s290
          // Predicated region
          $region67: #{tpu_custom_call.1} parent=65 // pred_check
            _
          $region68: #{tpu_custom_call.1} parent=65 // pred_check_branch
            %300 = sbr.rel (0) target = $region70
          $region69: #{tpu_custom_call.1} parent=65 // pred_region
            %s301 = scalar_lea.vmem %s295, 16
            %s302 = scalar_lea.vmem %s297, 16 [#allocation2]
            loop: start=0, step=1, limit=1
            $region71: #{tpu_custom_call.1} parent=69 // loop_pre_header
              _
            $region72: #{tpu_custom_call.1} parent=69 // loop_header
              %s304 = sphi 0, %s308
              %p305 = scmp.ge.s32.totalorder %s304, 1
              %s309 = sphi %s295, %s295
              %s310 = sphi %s297, %s297
            $region73: #{tpu_custom_call.1} parent=69 // loop_header_branch
              %307 = sbr.rel (%p305) target = $region77
            $region74: #{tpu_custom_call.1} parent=69 // loop_body
              %v311 = vld [vmem:[%s309] sm:$0xff]
              %312 = vst [vmem:[%s310] sm:$0xff] %v311
              %v313 = vld [vmem:[%s309 + $0x8] sm:$0xff]
              %314 = vst [vmem:[%s310 + $0x8] sm:$0xff] %v313
              %v315 = vld [vmem:[%s309 + $0x18] sm:$0xff]
              %316 = vst [vmem:[%s310 + $0x18] sm:$0xff] %v315
              %v317 = vld [vmem:[%s309 + $0x20] sm:$0xff]
              %318 = vst [vmem:[%s310 + $0x20] sm:$0xff] %v317
              %v319 = vld [vmem:[%s309 + $0x30] sm:$0xff]
              %320 = vst [vmem:[%s310 + $0x30] sm:$0xff] %v319
              %v321 = vld [vmem:[%s309 + $0x38] sm:$0xff]
              %322 = vst [vmem:[%s310 + $0x38] sm:$0xff] %v321
              %v323 = vld [vmem:[%s309 + $0x48] sm:$0xff]
              %324 = vst [vmem:[%s310 + $0x48] sm:$0xff] %v323
              %v325 = vld [vmem:[%s309 + $0x50] sm:$0xff]
              %326 = vst [vmem:[%s310 + $0x50] sm:$0xff] %v325
              %v327 = vld [vmem:[%s309 + $0x60] sm:$0xff]
              %328 = vst [vmem:[%s310 + $0x60] sm:$0xff] %v327
              %v329 = vld [vmem:[%s309 + $0x68] sm:$0xff]
              %330 = vst [vmem:[%s310 + $0x68] sm:$0xff] %v329
              %v331 = vld [vmem:[%s309 + $0x78] sm:$0xff]
              %332 = vst [vmem:[%s310 + $0x78] sm:$0xff] %v331
              %v333 = vld [vmem:[%s309 + $0x80] sm:$0xff]
              %334 = vst [vmem:[%s310 + $0x80] sm:$0xff] %v333
              %v335 = vld [vmem:[%s309 + $0x90] sm:$0xff]
              %336 = vst [vmem:[%s310 + $0x90] sm:$0xff] %v335
              %v337 = vld [vmem:[%s309 + $0x98] sm:$0xff]
              %338 = vst [vmem:[%s310 + $0x98] sm:$0xff] %v337
              %v339 = vld [vmem:[%s309 + $0xa8] sm:$0xff]
              %340 = vst [vmem:[%s310 + $0xa8] sm:$0xff] %v339
              %v341 = vld [vmem:[%s309 + $0xb0] sm:$0xff]
              %342 = vst [vmem:[%s310 + $0xb0] sm:$0xff] %v341
              %v343 = vld [vmem:[%s309 + $0xc0] sm:$0xff]
              %344 = vst [vmem:[%s310 + $0xc0] sm:$0xff] %v343
              %v345 = vld [vmem:[%s309 + $0xc8] sm:$0xff]
              %346 = vst [vmem:[%s310 + $0xc8] sm:$0xff] %v345
              %v347 = vld [vmem:[%s309 + $0xd8] sm:$0xff]
              %348 = vst [vmem:[%s310 + $0xd8] sm:$0xff] %v347
              %v349 = vld [vmem:[%s309 + $0xe0] sm:$0xff]
              %350 = vst [vmem:[%s310 + $0xe0] sm:$0xff] %v349
            $region75: #{tpu_custom_call.1} parent=69 // loop_footer
              %s308 = sadd.s32 1, %s304
            $region76: #{tpu_custom_call.1} parent=69 // loop_footer_branch
              %303 = sbr.rel target = $region72
            $region77: #{tpu_custom_call.1} parent=69 // loop_exit
              _
            %s352 = ssub.s32 4, 1
            loop: start=0, step=1, limit=1
            $region78: #{tpu_custom_call.1} parent=69 // loop_pre_header
              _
            $region79: #{tpu_custom_call.1} parent=69 // loop_header
              %s354 = sphi 0, %s358
              %p355 = scmp.ge.s32.totalorder %s354, 1
              %s359 = sphi %s301, %s301
              %s360 = sphi %s302, %s302
            $region80: #{tpu_custom_call.1} parent=69 // loop_header_branch
              %357 = sbr.rel (%p355) target = $region84
            $region81: #{tpu_custom_call.1} parent=69 // loop_body
              %v361 = vld [vmem:[%s359] sm:%s352]
              %362 = vst [vmem:[%s360] sm:%s352] %v361
              %v363 = vld [vmem:[%s359 + $0x18] sm:%s352]
              %364 = vst [vmem:[%s360 + $0x18] sm:%s352] %v363
              %v365 = vld [vmem:[%s359 + $0x30] sm:%s352]
              %366 = vst [vmem:[%s360 + $0x30] sm:%s352] %v365
              %v367 = vld [vmem:[%s359 + $0x48] sm:%s352]
              %368 = vst [vmem:[%s360 + $0x48] sm:%s352] %v367
              %v369 = vld [vmem:[%s359 + $0x60] sm:%s352]
              %370 = vst [vmem:[%s360 + $0x60] sm:%s352] %v369
              %v371 = vld [vmem:[%s359 + $0x78] sm:%s352]
              %372 = vst [vmem:[%s360 + $0x78] sm:%s352] %v371
              %v373 = vld [vmem:[%s359 + $0x90] sm:%s352]
              %374 = vst [vmem:[%s360 + $0x90] sm:%s352] %v373
              %v375 = vld [vmem:[%s359 + $0xa8] sm:%s352]
              %376 = vst [vmem:[%s360 + $0xa8] sm:%s352] %v375
              %v377 = vld [vmem:[%s359 + $0xc0] sm:%s352]
              %378 = vst [vmem:[%s360 + $0xc0] sm:%s352] %v377
              %v379 = vld [vmem:[%s359 + $0xd8] sm:%s352]
              %380 = vst [vmem:[%s360 + $0xd8] sm:%s352] %v379
            $region82: #{tpu_custom_call.1} parent=69 // loop_footer
              %s358 = sadd.s32 1, %s354
            $region83: #{tpu_custom_call.1} parent=69 // loop_footer_branch
              %353 = sbr.rel target = $region79
            $region84: #{tpu_custom_call.1} parent=69 // loop_exit
              _
          $region70: #{tpu_custom_call.1} parent=65 // pred_fallthru
            _
          // Predicated region
          $region85: #{tpu_custom_call.1} parent=65 // pred_check
            _
          $region86: #{tpu_custom_call.1} parent=65 // pred_check_branch
            %383 = sbr.rel (0) target = $region88
          $region87: #{tpu_custom_call.1} parent=65 // pred_region
            %384 = vsyncadd %s298, 2880
          $region88: #{tpu_custom_call.1} parent=65 // pred_fallthru
            _
        $region66: #{tpu_custom_call.1} parent=35 // pred_fallthru
          _
        %s385 = smul.u32 %s192, 240
        %s386 = scalar_lea.vmem [#allocation2], %s385
        %s387 = scalar_lea.sflag [#allocation3], %s192
        %s388 = smul.u32 10, 18
        %s389 = smul.u32 %s388, 1
        %s390 = sshll.u32 %s389, 4
        %391 = dma.done %s387, %s390
        %v392 = vld [vmem:[%s386] sm:$0xff]
        %v393 = vld [vmem:[%s386 + $0x8] sm:$0xff]
        %v394 = vld [vmem:[%s386 + $0x18] sm:$0xff]
        %v395 = vld [vmem:[%s386 + $0x20] sm:$0xff]
        %v396 = vld [vmem:[%s386 + $0x30] sm:$0xff]
        %v397 = vld [vmem:[%s386 + $0x38] sm:$0xff]
        %v398 = vld [vmem:[%s386 + $0x48] sm:$0xff]
        %v399 = vld [vmem:[%s386 + $0x50] sm:$0xff]
        %v400 = vld [vmem:[%s386 + $0x60] sm:$0xff]
        %v401 = vld [vmem:[%s386 + $0x68] sm:$0xff]
        %v402 = vld [vmem:[%s386 + $0x78] sm:$0xff]
        %v403 = vld [vmem:[%s386 + $0x80] sm:$0xff]
        %v404 = vld [vmem:[%s386 + $0x90] sm:$0xff]
        %v405 = vld [vmem:[%s386 + $0x98] sm:$0xff]
        %v406 = vld [vmem:[%s386 + $0xa8] sm:$0xff]
        %v407 = vld [vmem:[%s386 + $0xb0] sm:$0xff]
        %v408 = vld [vmem:[%s1] sm:$0x1]
        %v410 = vperm.slane %v408, 0
        %v412 = vmul.f32 %v392, %v410
        %v413 = vmul.f32 %v393, %v410
        %v414 = vmul.f32 %v394, %v410
        %v415 = vmul.f32 %v395, %v410
        %v416 = vmul.f32 %v396, %v410
        %v417 = vmul.f32 %v397, %v410
        %v418 = vmul.f32 %v398, %v410
        %v419 = vmul.f32 %v399, %v410
        %v420 = vmul.f32 %v400, %v410
        %v421 = vmul.f32 %v401, %v410
        %v422 = vmul.f32 %v402, %v410
        %v423 = vmul.f32 %v403, %v410
        %v424 = vmul.f32 %v404, %v410
        %v425 = vmul.f32 %v405, %v410
        %v426 = vmul.f32 %v406, %v410
        %v427 = vmul.f32 %v407, %v410
        %v428 = vld [vmem:[%s386 + $0x1] sm:$0xff]
        %v429 = vld [vmem:[%s386 + $0x9] sm:$0xff]
        %v430 = vld [vmem:[%s386 + $0x19] sm:$0xff]
        %v431 = vld [vmem:[%s386 + $0x21] sm:$0xff]
        %v432 = vld [vmem:[%s386 + $0x31] sm:$0xff]
        %v433 = vld [vmem:[%s386 + $0x39] sm:$0xff]
        %v434 = vld [vmem:[%s386 + $0x49] sm:$0xff]
        %v435 = vld [vmem:[%s386 + $0x51] sm:$0xff]
        %v436 = vld [vmem:[%s386 + $0x61] sm:$0xff]
        %v437 = vld [vmem:[%s386 + $0x69] sm:$0xff]
        %v438 = vld [vmem:[%s386 + $0x79] sm:$0xff]
        %v439 = vld [vmem:[%s386 + $0x81] sm:$0xff]
        %v440 = vld [vmem:[%s386 + $0x91] sm:$0xff]
        %v441 = vld [vmem:[%s386 + $0x99] sm:$0xff]
        %v442 = vld [vmem:[%s386 + $0xa9] sm:$0xff]
        %v443 = vld [vmem:[%s386 + $0xb1] sm:$0xff]
        %s444 = scalar_lea.vmem %s1, 1
        %v445 = vld [vmem:[%s444] sm:$0x1]
        %v447 = vperm.slane %v445, 0
        %v449 = vmul.f32 %v428, %v447
        %v450 = vmul.f32 %v429, %v447
        %v451 = vmul.f32 %v430, %v447
        %v452 = vmul.f32 %v431, %v447
        %v453 = vmul.f32 %v432, %v447
        %v454 = vmul.f32 %v433, %v447
        %v455 = vmul.f32 %v434, %v447
        %v456 = vmul.f32 %v435, %v447
        %v457 = vmul.f32 %v436, %v447
        %v458 = vmul.f32 %v437, %v447
        %v459 = vmul.f32 %v438, %v447
        %v460 = vmul.f32 %v439, %v447
        %v461 = vmul.f32 %v440, %v447
        %v462 = vmul.f32 %v441, %v447
        %v463 = vmul.f32 %v442, %v447
        %v464 = vmul.f32 %v443, %v447
        %v465 = vadd.f32 %v412, %v449
        %v466 = vadd.f32 %v413, %v450
        %v467 = vadd.f32 %v414, %v451
        %v468 = vadd.f32 %v415, %v452
        %v469 = vadd.f32 %v416, %v453
        %v470 = vadd.f32 %v417, %v454
        %v471 = vadd.f32 %v418, %v455
        %v472 = vadd.f32 %v419, %v456
        %v473 = vadd.f32 %v420, %v457
        %v474 = vadd.f32 %v421, %v458
        %v475 = vadd.f32 %v422, %v459
        %v476 = vadd.f32 %v423, %v460
        %v477 = vadd.f32 %v424, %v461
        %v478 = vadd.f32 %v425, %v462
        %v479 = vadd.f32 %v426, %v463
        %v480 = vadd.f32 %v427, %v464
        %v481 = vld [vmem:[%s386 + $0x2] sm:$0xff]
        %v482 = vld [vmem:[%s386 + $0xa] sm:$0xff]
        %v483 = vld [vmem:[%s386 + $0x1a] sm:$0xff]
        %v484 = vld [vmem:[%s386 + $0x22] sm:$0xff]
        %v485 = vld [vmem:[%s386 + $0x32] sm:$0xff]
        %v486 = vld [vmem:[%s386 + $0x3a] sm:$0xff]
        %v487 = vld [vmem:[%s386 + $0x4a] sm:$0xff]
        %v488 = vld [vmem:[%s386 + $0x52] sm:$0xff]
        %v489 = vld [vmem:[%s386 + $0x62] sm:$0xff]
        %v490 = vld [vmem:[%s386 + $0x6a] sm:$0xff]
        %v491 = vld [vmem:[%s386 + $0x7a] sm:$0xff]
        %v492 = vld [vmem:[%s386 + $0x82] sm:$0xff]
        %v493 = vld [vmem:[%s386 + $0x92] sm:$0xff]
        %v494 = vld [vmem:[%s386 + $0x9a] sm:$0xff]
        %v495 = vld [vmem:[%s386 + $0xaa] sm:$0xff]
        %v496 = vld [vmem:[%s386 + $0xb2] sm:$0xff]
        %s497 = scalar_lea.vmem %s1, 2
        %v498 = vld [vmem:[%s497] sm:$0x1]
        %v500 = vperm.slane %v498, 0
        %v502 = vmul.f32 %v481, %v500
        %v503 = vmul.f32 %v482, %v500
        %v504 = vmul.f32 %v483, %v500
        %v505 = vmul.f32 %v484, %v500
        %v506 = vmul.f32 %v485, %v500
        %v507 = vmul.f32 %v486, %v500
        %v508 = vmul.f32 %v487, %v500
        %v509 = vmul.f32 %v488, %v500
        %v510 = vmul.f32 %v489, %v500
        %v511 = vmul.f32 %v490, %v500
        %v512 = vmul.f32 %v491, %v500
        %v513 = vmul.f32 %v492, %v500
        %v514 = vmul.f32 %v493, %v500
        %v515 = vmul.f32 %v494, %v500
        %v516 = vmul.f32 %v495, %v500
        %v517 = vmul.f32 %v496, %v500
        %v518 = vadd.f32 %v465, %v502
        %v519 = vadd.f32 %v466, %v503
        %v520 = vadd.f32 %v467, %v504
        %v521 = vadd.f32 %v468, %v505
        %v522 = vadd.f32 %v469, %v506
        %v523 = vadd.f32 %v470, %v507
        %v524 = vadd.f32 %v471, %v508
        %v525 = vadd.f32 %v472, %v509
        %v526 = vadd.f32 %v473, %v510
        %v527 = vadd.f32 %v474, %v511
        %v528 = vadd.f32 %v475, %v512
        %v529 = vadd.f32 %v476, %v513
        %v530 = vadd.f32 %v477, %v514
        %v531 = vadd.f32 %v478, %v515
        %v532 = vadd.f32 %v479, %v516
        %v533 = vadd.f32 %v480, %v517
        %s534 = scalar_lea.vmem %s386, 24 [#allocation2]
        %v535 = vld [vmem:[%s534] sm:$0xff]
        %v536 = vld [vmem:[%s534 + $0x8] sm:$0xff]
        %v537 = vld [vmem:[%s534 + $0x18] sm:$0xff]
        %v538 = vld [vmem:[%s534 + $0x20] sm:$0xff]
        %v539 = vld [vmem:[%s534 + $0x30] sm:$0xff]
        %v540 = vld [vmem:[%s534 + $0x38] sm:$0xff]
        %v541 = vld [vmem:[%s534 + $0x48] sm:$0xff]
        %v542 = vld [vmem:[%s534 + $0x50] sm:$0xff]
        %v543 = vld [vmem:[%s534 + $0x60] sm:$0xff]
        %v544 = vld [vmem:[%s534 + $0x68] sm:$0xff]
        %v545 = vld [vmem:[%s534 + $0x78] sm:$0xff]
        %v546 = vld [vmem:[%s534 + $0x80] sm:$0xff]
        %v547 = vld [vmem:[%s534 + $0x90] sm:$0xff]
        %v548 = vld [vmem:[%s534 + $0x98] sm:$0xff]
        %v549 = vld [vmem:[%s534 + $0xa8] sm:$0xff]
        %v550 = vld [vmem:[%s534 + $0xb0] sm:$0xff]
        %s551 = scalar_lea.vmem %s1, 3
        %v552 = vld [vmem:[%s551] sm:$0x1]
        %v554 = vperm.slane %v552, 0
        %v556 = vmul.f32 %v535, %v554
        %v557 = vmul.f32 %v536, %v554
        %v558 = vmul.f32 %v537, %v554
        %v559 = vmul.f32 %v538, %v554
        %v560 = vmul.f32 %v539, %v554
        %v561 = vmul.f32 %v540, %v554
        %v562 = vmul.f32 %v541, %v554
        %v563 = vmul.f32 %v542, %v554
        %v564 = vmul.f32 %v543, %v554
        %v565 = vmul.f32 %v544, %v554
        %v566 = vmul.f32 %v545, %v554
        %v567 = vmul.f32 %v546, %v554
        %v568 = vmul.f32 %v547, %v554
        %v569 = vmul.f32 %v548, %v554
        %v570 = vmul.f32 %v549, %v554
        %v571 = vmul.f32 %v550, %v554
        %v572 = vadd.f32 %v518, %v556
        %v573 = vadd.f32 %v519, %v557
        %v574 = vadd.f32 %v520, %v558
        %v575 = vadd.f32 %v521, %v559
        %v576 = vadd.f32 %v522, %v560
        %v577 = vadd.f32 %v523, %v561
        %v578 = vadd.f32 %v524, %v562
        %v579 = vadd.f32 %v525, %v563
        %v580 = vadd.f32 %v526, %v564
        %v581 = vadd.f32 %v527, %v565
        %v582 = vadd.f32 %v528, %v566
        %v583 = vadd.f32 %v529, %v567
        %v584 = vadd.f32 %v530, %v568
        %v585 = vadd.f32 %v531, %v569
        %v586 = vadd.f32 %v532, %v570
        %v587 = vadd.f32 %v533, %v571
        %v588 = vld [vmem:[%s534 + $0x1] sm:$0xff]
        %v589 = vld [vmem:[%s534 + $0x9] sm:$0xff]
        %v590 = vld [vmem:[%s534 + $0x19] sm:$0xff]
        %v591 = vld [vmem:[%s534 + $0x21] sm:$0xff]
        %v592 = vld [vmem:[%s534 + $0x31] sm:$0xff]
        %v593 = vld [vmem:[%s534 + $0x39] sm:$0xff]
        %v594 = vld [vmem:[%s534 + $0x49] sm:$0xff]
        %v595 = vld [vmem:[%s534 + $0x51] sm:$0xff]
        %v596 = vld [vmem:[%s534 + $0x61] sm:$0xff]
        %v597 = vld [vmem:[%s534 + $0x69] sm:$0xff]
        %v598 = vld [vmem:[%s534 + $0x79] sm:$0xff]
        %v599 = vld [vmem:[%s534 + $0x81] sm:$0xff]
        %v600 = vld [vmem:[%s534 + $0x91] sm:$0xff]
        %v601 = vld [vmem:[%s534 + $0x99] sm:$0xff]
        %v602 = vld [vmem:[%s534 + $0xa9] sm:$0xff]
        %v603 = vld [vmem:[%s534 + $0xb1] sm:$0xff]
        %s604 = scalar_lea.vmem %s1, 4
        %v605 = vld [vmem:[%s604] sm:$0x1]
        %v607 = vperm.slane %v605, 0
        %v609 = vmul.f32 %v588, %v607
        %v610 = vmul.f32 %v589, %v607
        %v611 = vmul.f32 %v590, %v607
        %v612 = vmul.f32 %v591, %v607
        %v613 = vmul.f32 %v592, %v607
        %v614 = vmul.f32 %v593, %v607
        %v615 = vmul.f32 %v594, %v607
        %v616 = vmul.f32 %v595, %v607
        %v617 = vmul.f32 %v596, %v607
        %v618 = vmul.f32 %v597, %v607
        %v619 = vmul.f32 %v598, %v607
        %v620 = vmul.f32 %v599, %v607
        %v621 = vmul.f32 %v600, %v607
        %v622 = vmul.f32 %v601, %v607
        %v623 = vmul.f32 %v602, %v607
        %v624 = vmul.f32 %v603, %v607
        %v625 = vadd.f32 %v572, %v609
        %v626 = vadd.f32 %v573, %v610
        %v627 = vadd.f32 %v574, %v611
        %v628 = vadd.f32 %v575, %v612
        %v629 = vadd.f32 %v576, %v613
        %v630 = vadd.f32 %v577, %v614
        %v631 = vadd.f32 %v578, %v615
        %v632 = vadd.f32 %v579, %v616
        %v633 = vadd.f32 %v580, %v617
        %v634 = vadd.f32 %v581, %v618
        %v635 = vadd.f32 %v582, %v619
        %v636 = vadd.f32 %v583, %v620
        %v637 = vadd.f32 %v584, %v621
        %v638 = vadd.f32 %v585, %v622
        %v639 = vadd.f32 %v586, %v623
        %v640 = vadd.f32 %v587, %v624
        %v641 = vld [vmem:[%s534 + $0x2] sm:$0xff]
        %v642 = vld [vmem:[%s534 + $0xa] sm:$0xff]
        %v643 = vld [vmem:[%s534 + $0x1a] sm:$0xff]
        %v644 = vld [vmem:[%s534 + $0x22] sm:$0xff]
        %v645 = vld [vmem:[%s534 + $0x32] sm:$0xff]
        %v646 = vld [vmem:[%s534 + $0x3a] sm:$0xff]
        %v647 = vld [vmem:[%s534 + $0x4a] sm:$0xff]
        %v648 = vld [vmem:[%s534 + $0x52] sm:$0xff]
        %v649 = vld [vmem:[%s534 + $0x62] sm:$0xff]
        %v650 = vld [vmem:[%s534 + $0x6a] sm:$0xff]
        %v651 = vld [vmem:[%s534 + $0x7a] sm:$0xff]
        %v652 = vld [vmem:[%s534 + $0x82] sm:$0xff]
        %v653 = vld [vmem:[%s534 + $0x92] sm:$0xff]
        %v654 = vld [vmem:[%s534 + $0x9a] sm:$0xff]
        %v655 = vld [vmem:[%s534 + $0xaa] sm:$0xff]
        %v656 = vld [vmem:[%s534 + $0xb2] sm:$0xff]
        %s657 = scalar_lea.vmem %s1, 5
        %v658 = vld [vmem:[%s657] sm:$0x1]
        %v660 = vperm.slane %v658, 0
        %v662 = vmul.f32 %v641, %v660
        %v663 = vmul.f32 %v642, %v660
        %v664 = vmul.f32 %v643, %v660
        %v665 = vmul.f32 %v644, %v660
        %v666 = vmul.f32 %v645, %v660
        %v667 = vmul.f32 %v646, %v660
        %v668 = vmul.f32 %v647, %v660
        %v669 = vmul.f32 %v648, %v660
        %v670 = vmul.f32 %v649, %v660
        %v671 = vmul.f32 %v650, %v660
        %v672 = vmul.f32 %v651, %v660
        %v673 = vmul.f32 %v652, %v660
        %v674 = vmul.f32 %v653, %v660
        %v675 = vmul.f32 %v654, %v660
        %v676 = vmul.f32 %v655, %v660
        %v677 = vmul.f32 %v656, %v660
        %v678 = vadd.f32 %v625, %v662
        %v679 = vadd.f32 %v626, %v663
        %v680 = vadd.f32 %v627, %v664
        %v681 = vadd.f32 %v628, %v665
        %v682 = vadd.f32 %v629, %v666
        %v683 = vadd.f32 %v630, %v667
        %v684 = vadd.f32 %v631, %v668
        %v685 = vadd.f32 %v632, %v669
        %v686 = vadd.f32 %v633, %v670
        %v687 = vadd.f32 %v634, %v671
        %v688 = vadd.f32 %v635, %v672
        %v689 = vadd.f32 %v636, %v673
        %v690 = vadd.f32 %v637, %v674
        %v691 = vadd.f32 %v638, %v675
        %v692 = vadd.f32 %v639, %v676
        %v693 = vadd.f32 %v640, %v677
        %s694 = scalar_lea.vmem %s386, 48 [#allocation2]
        %v695 = vld [vmem:[%s694] sm:$0xff]
        %v696 = vld [vmem:[%s694 + $0x8] sm:$0xff]
        %v697 = vld [vmem:[%s694 + $0x18] sm:$0xff]
        %v698 = vld [vmem:[%s694 + $0x20] sm:$0xff]
        %v699 = vld [vmem:[%s694 + $0x30] sm:$0xff]
        %v700 = vld [vmem:[%s694 + $0x38] sm:$0xff]
        %v701 = vld [vmem:[%s694 + $0x48] sm:$0xff]
        %v702 = vld [vmem:[%s694 + $0x50] sm:$0xff]
        %v703 = vld [vmem:[%s694 + $0x60] sm:$0xff]
        %v704 = vld [vmem:[%s694 + $0x68] sm:$0xff]
        %v705 = vld [vmem:[%s694 + $0x78] sm:$0xff]
        %v706 = vld [vmem:[%s694 + $0x80] sm:$0xff]
        %v707 = vld [vmem:[%s694 + $0x90] sm:$0xff]
        %v708 = vld [vmem:[%s694 + $0x98] sm:$0xff]
        %v709 = vld [vmem:[%s694 + $0xa8] sm:$0xff]
        %v710 = vld [vmem:[%s694 + $0xb0] sm:$0xff]
        %s711 = scalar_lea.vmem %s1, 6
        %v712 = vld [vmem:[%s711] sm:$0x1]
        %v714 = vperm.slane %v712, 0
        %v716 = vmul.f32 %v695, %v714
        %v717 = vmul.f32 %v696, %v714
        %v718 = vmul.f32 %v697, %v714
        %v719 = vmul.f32 %v698, %v714
        %v720 = vmul.f32 %v699, %v714
        %v721 = vmul.f32 %v700, %v714
        %v722 = vmul.f32 %v701, %v714
        %v723 = vmul.f32 %v702, %v714
        %v724 = vmul.f32 %v703, %v714
        %v725 = vmul.f32 %v704, %v714
        %v726 = vmul.f32 %v705, %v714
        %v727 = vmul.f32 %v706, %v714
        %v728 = vmul.f32 %v707, %v714
        %v729 = vmul.f32 %v708, %v714
        %v730 = vmul.f32 %v709, %v714
        %v731 = vmul.f32 %v710, %v714
        %v732 = vadd.f32 %v678, %v716
        %v733 = vadd.f32 %v679, %v717
        %v734 = vadd.f32 %v680, %v718
        %v735 = vadd.f32 %v681, %v719
        %v736 = vadd.f32 %v682, %v720
        %v737 = vadd.f32 %v683, %v721
        %v738 = vadd.f32 %v684, %v722
        %v739 = vadd.f32 %v685, %v723
        %v740 = vadd.f32 %v686, %v724
        %v741 = vadd.f32 %v687, %v725
        %v742 = vadd.f32 %v688, %v726
        %v743 = vadd.f32 %v689, %v727
        %v744 = vadd.f32 %v690, %v728
        %v745 = vadd.f32 %v691, %v729
        %v746 = vadd.f32 %v692, %v730
        %v747 = vadd.f32 %v693, %v731
        %v748 = vld [vmem:[%s694 + $0x1] sm:$0xff]
        %v749 = vld [vmem:[%s694 + $0x9] sm:$0xff]
        %v750 = vld [vmem:[%s694 + $0x19] sm:$0xff]
        %v751 = vld [vmem:[%s694 + $0x21] sm:$0xff]
        %v752 = vld [vmem:[%s694 + $0x31] sm:$0xff]
        %v753 = vld [vmem:[%s694 + $0x39] sm:$0xff]
        %v754 = vld [vmem:[%s694 + $0x49] sm:$0xff]
        %v755 = vld [vmem:[%s694 + $0x51] sm:$0xff]
        %v756 = vld [vmem:[%s694 + $0x61] sm:$0xff]
        %v757 = vld [vmem:[%s694 + $0x69] sm:$0xff]
        %v758 = vld [vmem:[%s694 + $0x79] sm:$0xff]
        %v759 = vld [vmem:[%s694 + $0x81] sm:$0xff]
        %v760 = vld [vmem:[%s694 + $0x91] sm:$0xff]
        %v761 = vld [vmem:[%s694 + $0x99] sm:$0xff]
        %v762 = vld [vmem:[%s694 + $0xa9] sm:$0xff]
        %v763 = vld [vmem:[%s694 + $0xb1] sm:$0xff]
        %s764 = scalar_lea.vmem %s1, 7
        %v765 = vld [vmem:[%s764] sm:$0x1]
        %v767 = vperm.slane %v765, 0
        %v769 = vmul.f32 %v748, %v767
        %v770 = vmul.f32 %v749, %v767
        %v771 = vmul.f32 %v750, %v767
        %v772 = vmul.f32 %v751, %v767
        %v773 = vmul.f32 %v752, %v767
        %v774 = vmul.f32 %v753, %v767
        %v775 = vmul.f32 %v754, %v767
        %v776 = vmul.f32 %v755, %v767
        %v777 = vmul.f32 %v756, %v767
        %v778 = vmul.f32 %v757, %v767
        %v779 = vmul.f32 %v758, %v767
        %v780 = vmul.f32 %v759, %v767
        %v781 = vmul.f32 %v760, %v767
        %v782 = vmul.f32 %v761, %v767
        %v783 = vmul.f32 %v762, %v767
        %v784 = vmul.f32 %v763, %v767
        %v785 = vadd.f32 %v732, %v769
        %v786 = vadd.f32 %v733, %v770
        %v787 = vadd.f32 %v734, %v771
        %v788 = vadd.f32 %v735, %v772
        %v789 = vadd.f32 %v736, %v773
        %v790 = vadd.f32 %v737, %v774
        %v791 = vadd.f32 %v738, %v775
        %v792 = vadd.f32 %v739, %v776
        %v793 = vadd.f32 %v740, %v777
        %v794 = vadd.f32 %v741, %v778
        %v795 = vadd.f32 %v742, %v779
        %v796 = vadd.f32 %v743, %v780
        %v797 = vadd.f32 %v744, %v781
        %v798 = vadd.f32 %v745, %v782
        %v799 = vadd.f32 %v746, %v783
        %v800 = vadd.f32 %v747, %v784
        %v801 = vld [vmem:[%s694 + $0x2] sm:$0xff]
        %v802 = vld [vmem:[%s694 + $0xa] sm:$0xff]
        %v803 = vld [vmem:[%s694 + $0x1a] sm:$0xff]
        %v804 = vld [vmem:[%s694 + $0x22] sm:$0xff]
        %v805 = vld [vmem:[%s694 + $0x32] sm:$0xff]
        %v806 = vld [vmem:[%s694 + $0x3a] sm:$0xff]
        %v807 = vld [vmem:[%s694 + $0x4a] sm:$0xff]
        %v808 = vld [vmem:[%s694 + $0x52] sm:$0xff]
        %v809 = vld [vmem:[%s694 + $0x62] sm:$0xff]
        %v810 = vld [vmem:[%s694 + $0x6a] sm:$0xff]
        %v811 = vld [vmem:[%s694 + $0x7a] sm:$0xff]
        %v812 = vld [vmem:[%s694 + $0x82] sm:$0xff]
        %v813 = vld [vmem:[%s694 + $0x92] sm:$0xff]
        %v814 = vld [vmem:[%s694 + $0x9a] sm:$0xff]
        %v815 = vld [vmem:[%s694 + $0xaa] sm:$0xff]
        %v816 = vld [vmem:[%s694 + $0xb2] sm:$0xff]
        %s817 = scalar_lea.vmem %s1, 8
        %v818 = vld [vmem:[%s817] sm:$0x1]
        %v820 = vperm.slane %v818, 0
        %v822 = vmul.f32 %v801, %v820
        %v823 = vmul.f32 %v802, %v820
        %v824 = vmul.f32 %v803, %v820
        %v825 = vmul.f32 %v804, %v820
        %v826 = vmul.f32 %v805, %v820
        %v827 = vmul.f32 %v806, %v820
        %v828 = vmul.f32 %v807, %v820
        %v829 = vmul.f32 %v808, %v820
        %v830 = vmul.f32 %v809, %v820
        %v831 = vmul.f32 %v810, %v820
        %v832 = vmul.f32 %v811, %v820
        %v833 = vmul.f32 %v812, %v820
        %v834 = vmul.f32 %v813, %v820
        %v835 = vmul.f32 %v814, %v820
        %v836 = vmul.f32 %v815, %v820
        %v837 = vmul.f32 %v816, %v820
        %v838 = vadd.f32 %v785, %v822
        %v839 = vadd.f32 %v786, %v823
        %v840 = vadd.f32 %v787, %v824
        %v841 = vadd.f32 %v788, %v825
        %v842 = vadd.f32 %v789, %v826
        %v843 = vadd.f32 %v790, %v827
        %v844 = vadd.f32 %v791, %v828
        %v845 = vadd.f32 %v792, %v829
        %v846 = vadd.f32 %v793, %v830
        %v847 = vadd.f32 %v794, %v831
        %v848 = vadd.f32 %v795, %v832
        %v849 = vadd.f32 %v796, %v833
        %v850 = vadd.f32 %v797, %v834
        %v851 = vadd.f32 %v798, %v835
        %v852 = vadd.f32 %v799, %v836
        %v853 = vadd.f32 %v800, %v837
        %v854 = vld [vmem:[%s2] sm:$0x1]
        %v856 = vperm.slane %v854, 0
        %v858 = vadd.f32 %v838, %v856
        %v859 = vadd.f32 %v839, %v856
        %v860 = vadd.f32 %v840, %v856
        %v861 = vadd.f32 %v841, %v856
        %v862 = vadd.f32 %v842, %v856
        %v863 = vadd.f32 %v843, %v856
        %v864 = vadd.f32 %v844, %v856
        %v865 = vadd.f32 %v845, %v856
        %v866 = vadd.f32 %v846, %v856
        %v867 = vadd.f32 %v847, %v856
        %v868 = vadd.f32 %v848, %v856
        %v869 = vadd.f32 %v849, %v856
        %v870 = vadd.f32 %v850, %v856
        %v871 = vadd.f32 %v851, %v856
        %v872 = vadd.f32 %v852, %v856
        %v873 = vadd.f32 %v853, %v856
        %v874 = vmax.f32 %v858, 0.0
        %v875 = vmax.f32 %v859, 0.0
        %v876 = vmax.f32 %v860, 0.0
        %v877 = vmax.f32 %v861, 0.0
        %v878 = vmax.f32 %v862, 0.0
        %v879 = vmax.f32 %v863, 0.0
        %v880 = vmax.f32 %v864, 0.0
        %v881 = vmax.f32 %v865, 0.0
        %v882 = vmax.f32 %v866, 0.0
        %v883 = vmax.f32 %v867, 0.0
        %v884 = vmax.f32 %v868, 0.0
        %v885 = vmax.f32 %v869, 0.0
        %v886 = vmax.f32 %v870, 0.0
        %v887 = vmax.f32 %v871, 0.0
        %v888 = vmax.f32 %v872, 0.0
        %v889 = vmax.f32 %v873, 0.0
        %v890 = vpack.c.bf16 %v875, %v874
        %v891 = vpack.c.bf16 %v877, %v876
        %v892 = vpack.c.bf16 %v879, %v878
        %v893 = vpack.c.bf16 %v881, %v880
        %v894 = vpack.c.bf16 %v883, %v882
        %v895 = vpack.c.bf16 %v885, %v884
        %v896 = vpack.c.bf16 %v887, %v886
        %v897 = vpack.c.bf16 %v889, %v888
        %v898 = vld [vmem:[%s3] sm:$0xf]
        %v899 = vld [vmem:[%s3 + $0x4] sm:$0xf]
        %v900 = vld [vmem:[%s3 + $0x8] sm:$0xf]
        %v901 = vld [vmem:[%s3 + $0xc] sm:$0xf]
        %v902 = vld [vmem:[%s3 + $0x10] sm:$0xf]
        %v903 = vld [vmem:[%s3 + $0x14] sm:$0xf]
        %v904 = vld [vmem:[%s3 + $0x18] sm:$0xf]
        %v905 = vld [vmem:[%s3 + $0x1c] sm:$0xf]
        %v906 = vld [vmem:[%s3 + $0x20] sm:$0xf]
        %v907 = vld [vmem:[%s3 + $0x24] sm:$0xf]
        %v908 = vld [vmem:[%s3 + $0x28] sm:$0xf]
        %v909 = vld [vmem:[%s3 + $0x2c] sm:$0xf]
        %v910 = vld [vmem:[%s3 + $0x30] sm:$0xf]
        %v911 = vld [vmem:[%s3 + $0x34] sm:$0xf]
        %v912 = vld [vmem:[%s3 + $0x38] sm:$0xf]
        %v913 = vld [vmem:[%s3 + $0x3c] sm:$0xf]
        %v914 = vld [vmem:[%s4] sm:$0x1]
        %v916 = vperm.slane %v914, 0
        %v934 = vunpack.c.l.b16 %v898
        %v935 = vunpack.c.l.b16 %v899
        %v936 = vunpack.c.l.b16 %v900
        %v937 = vunpack.c.l.b16 %v901
        %v938 = vunpack.c.l.b16 %v902
        %v939 = vunpack.c.l.b16 %v903
        %v940 = vunpack.c.l.b16 %v904
        %v941 = vunpack.c.l.b16 %v905
        %v942 = vunpack.c.l.b16 %v906
        %v943 = vunpack.c.l.b16 %v907
        %v944 = vunpack.c.l.b16 %v908
        %v945 = vunpack.c.l.b16 %v909
        %v946 = vunpack.c.l.b16 %v910
        %v947 = vunpack.c.l.b16 %v911
        %v948 = vunpack.c.l.b16 %v912
        %v949 = vunpack.c.l.b16 %v913
        %v950 = vpack.c.b16 %v935, %v934
        %v951 = vpack.c.b16 %v937, %v936
        %v952 = vpack.c.b16 %v939, %v938
        %v953 = vpack.c.b16 %v941, %v940
        %v954 = vpack.c.b16 %v943, %v942
        %v955 = vpack.c.b16 %v945, %v944
        %v956 = vpack.c.b16 %v947, %v946
        %v957 = vpack.c.b16 %v949, %v948
        %966 = vmatpush.bf16.msra.mxu0 %v957
        %967 = vmatpush.bf16.msra.mxu0 %v956
        %968 = vmatpush.bf16.msra.mxu0 %v955
        %969 = vmatpush.bf16.msra.mxu0 %v954
        %970 = vmatpush.bf16.msra.mxu0 %v953
        %971 = vmatpush.bf16.msra.mxu0 %v952
        %972 = vmatpush.bf16.msra.mxu0 %v951
        %973 = vmatpush.bf16.msra.mxu0 %v950
        %974 = vmatmul.bf16.gmra.mxu0 %v890
        %v975 = vpop.f32.mrf.mxu0
        %v976 = vadd.f32 %v916, %v975
        %v977 = vpop.f32.mrf.mxu0
        %v978 = vadd.f32 %v916, %v977
        %979 = vmatmul.bf16.gmra.mxu0 %v891
        %v980 = vpop.f32.mrf.mxu0
        %v981 = vadd.f32 %v916, %v980
        %v982 = vpop.f32.mrf.mxu0
        %v983 = vadd.f32 %v916, %v982
        %984 = vmatmul.bf16.gmra.mxu0 %v892
        %v985 = vpop.f32.mrf.mxu0
        %v986 = vadd.f32 %v916, %v985
        %v987 = vpop.f32.mrf.mxu0
        %v988 = vadd.f32 %v916, %v987
        %989 = vmatmul.bf16.gmra.mxu0 %v893
        %v990 = vpop.f32.mrf.mxu0
        %v991 = vadd.f32 %v916, %v990
        %v992 = vpop.f32.mrf.mxu0
        %v993 = vadd.f32 %v916, %v992
        %994 = vmatmul.bf16.gmra.mxu0 %v894
        %v995 = vpop.f32.mrf.mxu0
        %v996 = vadd.f32 %v916, %v995
        %v997 = vpop.f32.mrf.mxu0
        %v998 = vadd.f32 %v916, %v997
        %999 = vmatmul.bf16.gmra.mxu0 %v895
        %v1000 = vpop.f32.mrf.mxu0
        %v1001 = vadd.f32 %v916, %v1000
        %v1002 = vpop.f32.mrf.mxu0
        %v1003 = vadd.f32 %v916, %v1002
        %1004 = vmatmul.bf16.gmra.mxu0 %v896
        %v1005 = vpop.f32.mrf.mxu0
        %v1006 = vadd.f32 %v916, %v1005
        %v1007 = vpop.f32.mrf.mxu0
        %v1008 = vadd.f32 %v916, %v1007
        %1009 = vmatmul.bf16.gmra.mxu0 %v897
        %v1010 = vpop.f32.mrf.mxu0
        %v1011 = vadd.f32 %v916, %v1010
        %v1012 = vpop.f32.mrf.mxu0
        %v1013 = vadd.f32 %v916, %v1012
        %1014 = vdwg.mxu0
        %v1015 = vmax.f32 %v976, 0.0
        %v1016 = vmax.f32 %v978, 0.0
        %v1017 = vmax.f32 %v981, 0.0
        %v1018 = vmax.f32 %v983, 0.0
        %v1019 = vmax.f32 %v986, 0.0
        %v1020 = vmax.f32 %v988, 0.0
        %v1021 = vmax.f32 %v991, 0.0
        %v1022 = vmax.f32 %v993, 0.0
        %v1023 = vmax.f32 %v996, 0.0
        %v1024 = vmax.f32 %v998, 0.0
        %v1025 = vmax.f32 %v1001, 0.0
        %v1026 = vmax.f32 %v1003, 0.0
        %v1027 = vmax.f32 %v1006, 0.0
        %v1028 = vmax.f32 %v1008, 0.0
        %v1029 = vmax.f32 %v1011, 0.0
        %v1030 = vmax.f32 %v1013, 0.0
        %1031 = vst [vmem:[%s190] sm:$0xff] %v1015
        %1032 = vst [vmem:[%s190 + $0x8] sm:$0xff] %v1016
        %1033 = vst [vmem:[%s190 + $0x10] sm:$0xff] %v1017
        %1034 = vst [vmem:[%s190 + $0x18] sm:$0xff] %v1018
        %1035 = vst [vmem:[%s190 + $0x20] sm:$0xff] %v1019
        %1036 = vst [vmem:[%s190 + $0x28] sm:$0xff] %v1020
        %1037 = vst [vmem:[%s190 + $0x30] sm:$0xff] %v1021
        %1038 = vst [vmem:[%s190 + $0x38] sm:$0xff] %v1022
        %1039 = vst [vmem:[%s190 + $0x40] sm:$0xff] %v1023
        %1040 = vst [vmem:[%s190 + $0x48] sm:$0xff] %v1024
        %1041 = vst [vmem:[%s190 + $0x50] sm:$0xff] %v1025
        %1042 = vst [vmem:[%s190 + $0x58] sm:$0xff] %v1026
        %1043 = vst [vmem:[%s190 + $0x60] sm:$0xff] %v1027
        %1044 = vst [vmem:[%s190 + $0x68] sm:$0xff] %v1028
        %1045 = vst [vmem:[%s190 + $0x70] sm:$0xff] %v1029
        %1046 = vst [vmem:[%s190 + $0x78] sm:$0xff] %v1030
        %s1047 = sand.u32 %s125, 1
        %s1048 = scalar_lea.sflag [#allocation5], %s1047
        %s1049 = sand.u32 %s125, 1
        %s1050 = smul.addr %s1049, 128
        %s1051 = scalar_lea.vmem [#allocation4], %s1050
        // Predicated region
        $region89: #{tpu_custom_call.1} parent=35 // pred_check
          %p1052 = pneg %p135
        $region90: #{tpu_custom_call.1} parent=35 // pred_check_branch
          %1054 = sbr.rel (%p1052) target = $region92
        $region91: #{tpu_custom_call.1} parent=35 // pred_region
          %s1055 = smul.u32 16, %s24
          %1057 = vsyncadd %s1048, 0
          %s1058 = smul.addr %s23, 32
          %s1059 = sadd.s32 %s1055, %s1058
          %s1060 = smul.addr %s1059, 8
          %s1061 = scalar_lea.hbm %s5, %s1060
          %s1062 = sshll.u32 %s1051, 4
          %s1063 = int_to_ptr.vmem [resolvable:$true] %s1062
          %s1064 = sshll.u32 %s1061, 4
          %s1065 = int_to_ptr.hbm [resolvable:$true] %s1064
          %1070 = dma.vmem_to_hbm [thread:$0]  %s1063, 2048, %s1065, %s1048, 128, 128, 8
        $region92: #{tpu_custom_call.1} parent=35 // pred_fallthru
          _
      $region36: #{tpu_custom_call.1} parent=5 // pred_fallthru
        _
      %p1071 = scmp.le.s32.totalorder 2, %s14
      // Predicated region
      $region93: #{tpu_custom_call.1} parent=5 // pred_check
        %p1072 = pneg %p1071
      $region94: #{tpu_custom_call.1} parent=5 // pred_check_branch
        %1074 = sbr.rel (%p1072) target = $region96
      $region95: #{tpu_custom_call.1} parent=5 // pred_region
        %s1075 = ssub.s32 %s14, 2
        // Predicated region
        $region97: #{tpu_custom_call.1} parent=95 // pred_check
          %p1076 = pneg %p141
        $region98: #{tpu_custom_call.1} parent=95 // pred_check_branch
          %1078 = sbr.rel (%p1076) target = $region100
        $region99: #{tpu_custom_call.1} parent=95 // pred_region
          %s1079 = sand.u32 %s126, 1
          %s1080 = scalar_lea.sflag [#allocation5], %s1079
          %s1081 = sand.u32 %s126, 1
          %s1082 = smul.addr %s1081, 128
          %s1083 = scalar_lea.vmem [#allocation4], %s1082
          %1085 = dma.done %s1080, 2048
        $region100: #{tpu_custom_call.1} parent=95 // pred_fallthru
          _
      $region96: #{tpu_custom_call.1} parent=5 // pred_fallthru
        _
    $region6: #{tpu_custom_call.1} parent=1 // loop_footer
      %s18 = sadd.s32 1, %s14
    $region7: #{tpu_custom_call.1} parent=1 // loop_footer_branch
      %13 = sbr.rel target = $region3
    $region8: #{tpu_custom_call.1} parent=1 // loop_exit
      _
    %1086 = vsyncpa [#allocation5], 1
    %s1087 = scalar_lea.sflag [#allocation5], 1
    %1088 = vsyncpa %s1087, 1
  %1089 = vsyncmov [#allocation3]
  %s1090 = vpop.sfrf %1089
  %p1091 = scmp.eq.s32.totalorder %s1090, 0
  %p1092 = pneg %p1091
  %1094 = shalt.err (%p1092)
  %s1095 = scalar_lea.sflag [#allocation3], 1
  %1096 = vsyncmov %s1095
  %s1097 = vpop.sfrf %1096
  %p1098 = scmp.eq.s32.totalorder %s1097, 0
  %p1099 = pneg %p1098
  %1101 = shalt.err (%p1099)

</llo_original>
